<compile_context>
chip_gen: v6e
topology: v6e:2x2x1
jax: 0.10.0
libtpu: 0.0.40
codegen_flags: <defaults>
</compile_context>

<pallas_src>
import math
import numpy as np
import jax
import jax.numpy as jnp
from jax.experimental import pallas as pl
from jax.experimental.pallas import tpu as pltpu

# ---------------------------------------------------------------------------
# Synthetic "character" + network config (fixed, matching the original setup):
# conv(8,k3,s1)+relu -> batch_norm -> pool2 -> conv(16,k3,s1)+relu -> pool2
# -> flatten -> fc(32)+relu -> fc_layers(6 * num_parts)
# ---------------------------------------------------------------------------
IMAGE_SIZE = 16
IN_CHANNELS = 4
CHAR_TREE = ["torso", "head", "arm", "hand"]
PARENTS = [-1, 0, 0, 2]            # parent index per part (part 0 is the root)
NUM_PARTS = len(CHAR_TREE)
WEIGHT_SCALING = 0.1
CANONICAL_BIAS = {
    "torso": [1.0, 0.0, 0.0, 0.0, 1.0, 0.0],
    "head":  [1.0, 0.0, 0.0, 0.0, 1.0, -4.0],
    "arm":   [1.0, 0.0, 3.0, 0.0, 1.0, 0.0],
    "hand":  [1.0, 0.0, 5.0, 0.0, 1.0, 1.0],
}
BN_EPS = 1e-5

C1 = 8          # conv1 out channels
C2 = 16         # conv2 out channels
H1 = W1 = 14    # conv1 spatial output
P1 = 7          # pool1 spatial output
W2NEED = 4      # conv2 output positions actually needed (pool2 floor drops idx 4)
FC1_OUT = 32
FC2_OUT = NUM_PARTS * 6


# ---------------------------------------------------------------------------
# Parameter init (identical math to the previous version)
# ---------------------------------------------------------------------------
def _xavier_uniform(key, shape, fan_in, fan_out, gain):
    bound = gain * math.sqrt(6.0 / (fan_in + fan_out))
    return jax.random.uniform(key, shape, jnp.float32, -bound, bound)


def init_params(key):
    ks = jax.random.split(key, 8)
    k = 3
    fc1_in = C2 * 2 * 2
    p = {}
    p["conv1_w"] = _xavier_uniform(ks[0], (C1, IN_CHANNELS, k, k),
                                   IN_CHANNELS * k * k, C1 * k * k, WEIGHT_SCALING)
    p["conv1_b"] = 0.01 * jax.random.normal(ks[1], (C1,), jnp.float32)
    p["bn_gamma"] = jnp.ones((C1,), jnp.float32)
    p["bn_beta"] = jnp.zeros((C1,), jnp.float32)
    p["conv2_w"] = _xavier_uniform(ks[2], (C2, C1, k, k),
                                   C1 * k * k, C2 * k * k, WEIGHT_SCALING)
    p["conv2_b"] = 0.01 * jax.random.normal(ks[3], (C2,), jnp.float32)
    p["fc1_w"] = _xavier_uniform(ks[4], (FC1_OUT, fc1_in), fc1_in, FC1_OUT, WEIGHT_SCALING)
    p["fc1_b"] = 0.01 * jax.random.normal(ks[5], (FC1_OUT,), jnp.float32)
    p["fc2_w"] = _xavier_uniform(ks[6], (FC2_OUT, FC1_OUT), FC1_OUT, FC2_OUT, WEIGHT_SCALING)
    bias = []
    for part in CHAR_TREE:
        pb = list(CANONICAL_BIAS[part])
        pb[2] /= IMAGE_SIZE / 2
        pb[5] /= IMAGE_SIZE / 2
        bias += pb
    p["fc2_b"] = jnp.asarray(bias, jnp.float32)   # (double in torch; f32 on TPU)
    return p


# ---------------------------------------------------------------------------
# Init-time weight re-layouts (run once; nothing is re-laid-out per forward)
# ---------------------------------------------------------------------------
def _build_band1(conv1_w):
    """(64*3, 112) banded matrix: xcat(h) @ band = conv1 row h, columns ordered
    as parity*56 + (w//2)*8 + o (w-parity split baked in for pooling)."""
    w = np.asarray(conv1_w)                      # (8, 4, 3, 3)
    O, C, KH, KW = w.shape
    Wi, Wo = IMAGE_SIZE, W1
    band = np.zeros((KH * Wi * C, Wo * O), np.float32)
    for di in range(KH):
        for dj in range(KW):
            for c in range(C):
                for o in range(O):
                    for w1 in range(Wo):
                        w_in = w1 + dj
                        row = di * (Wi * C) + w_in * C + c
                        col = (w1 % 2) * ((Wo // 2) * O) + (w1 // 2) * O + o
                        band[row, col] = w[o, c, di, dj]
    return jnp.asarray(band)


def _build_band2(conv2_w):
    """(56*3, 64) banded matrix for conv2; only the 4 w-positions kept by pool2
    are produced, columns ordered parity*32 + (w//2)*16 + o."""
    w = np.asarray(conv2_w)                      # (16, 8, 3, 3)
    O, C, KH, KW = w.shape
    Wi = P1
    band = np.zeros((KH * Wi * C, W2NEED * O), np.float32)
    for di in range(KH):
        for dj in range(KW):
            for c in range(C):
                for o in range(O):
                    for w2 in range(W2NEED):
                        w_in = w2 + dj
                        row = di * (Wi * C) + w_in * C + c
                        col = (w2 % 2) * ((W2NEED // 2) * O) + (w2 // 2) * O + o
                        band[row, col] = w[o, c, di, dj]
    return jnp.asarray(band)


def _permute_fc1(fc1_w):
    """Permute fc1 input columns from torch NCHW-flatten order (o*4+ho*2+wo)
    to the kernel's feature order (ho*32 + wo*16 + o); also transpose."""
    w = np.asarray(fc1_w)                        # (32, 64)
    out = np.zeros((w.shape[1], w.shape[0]), np.float32)
    for ho in range(2):
        for wo in range(2):
            for o in range(C2):
                j_kernel = ho * 32 + wo * 16 + o
                j_torch = o * 4 + ho * 2 + wo
                out[j_kernel, :] = w[:, j_torch]
    return jnp.asarray(out)


def prepare_params(p):
    prep = {}
    prep["w1_band"] = _build_band1(p["conv1_w"])                       # (192, 112)
    prep["b1_t"] = jnp.tile(p["conv1_b"], W1).reshape(1, W1 * C1)      # (1, 112)
    prep["gamma"] = p["bn_gamma"].reshape(1, C1)
    prep["beta"] = p["bn_beta"].reshape(1, C1)
    prep["w2_band"] = _build_band2(p["conv2_w"])                       # (168, 64)
    prep["b2_t"] = jnp.tile(p["conv2_b"], W2NEED).reshape(1, W2NEED * C2)  # (1, 64)
    prep["fc1_w"] = _permute_fc1(p["fc1_w"])                           # (64, 32)
    prep["fc1_b"] = p["fc1_b"].reshape(1, FC1_OUT)
    prep["fc2_wT"] = jnp.asarray(p["fc2_w"]).T                         # (32, 24)
    prep["fc2_b"] = p["fc2_b"].reshape(1, FC2_OUT)
    return prep


# ---------------------------------------------------------------------------
# The fused Pallas kernel
# ---------------------------------------------------------------------------
def _full_spec(shape):
    nd = len(shape)
    return pl.BlockSpec(shape, lambda i, _nd=nd: (0,) * _nd)


def _make_fused_kernel(B):
    H0 = IMAGE_SIZE
    HALF1 = (W1 // 2) * C1          # 56
    HALF2 = (W2NEED // 2) * C2      # 32
    NPOS1 = B * H1 * W1             # positions for batch-norm stats

    def kernel(x_ref, w1_ref, b1_ref, g_ref, bt_ref, w2_ref, b2_ref,
               f1w_ref, f1b_ref, f2w_ref, f2b_ref, o_ref):
        f32 = jnp.float32
        w1 = w1_ref[...]
        b1 = b1_ref[...]
        w2 = w2_ref[...]
        b2 = b2_ref[...]
        gamma = g_ref[...]
        beta = bt_ref[...]

        # ---- conv1 + bias + ReLU (banded matmul; both w-parities in the weight)
        y1 = []
        for b in range(B):
            rows = [x_ref[pl.ds(b * H0 + di, H1), :] for di in range(3)]   # (14, 64)
            xcat = jnp.concatenate(rows, axis=1)                           # (14, 192)
            y = jnp.dot(xcat, w1, preferred_element_type=f32)              # (14, 112)
            y = jnp.maximum(y + b1, 0.0)
            y1.append(y)

        # ---- batch-norm (training-mode batch statistics, per channel)
        colsum = y1[0].sum(axis=0, keepdims=True)
        for b in range(1, B):
            colsum = colsum + y1[b].sum(axis=0, keepdims=True)             # (1, 112)
        ch_sum = colsum[:, 0:C1]
        for k in range(1, W1):
            ch_sum = ch_sum + colsum[:, k * C1:(k + 1) * C1]               # (1, 8)
        mean = ch_sum / NPOS1
        mean_b = jnp.concatenate([mean] * W1, axis=1)                      # (1, 112)
        sqsum = ((y1[0] - mean_b) ** 2).sum(axis=0, keepdims=True)
        for b in range(1, B):
            sqsum = sqsum + ((y1[b] - mean_b) ** 2).sum(axis=0, keepdims=True)
        ch_sq = sqsum[:, 0:C1]
        for k in range(1, W1):
            ch_sq = ch_sq + sqsum[:, k * C1:(k + 1) * C1]
        var = ch_sq / NPOS1
        inv = jax.lax.rsqrt(var + BN_EPS)
        sc8 = inv * gamma
        sh8 = beta - mean * sc8
        scale = jnp.concatenate([sc8] * W1, axis=1)                        # (1, 112)
        shift = jnp.concatenate([sh8] * W1, axis=1)

        # ---- per image: pool1 -> conv2+ReLU -> pool2 -> flatten
        feats = []
        for b in range(B):
            yn = y1[b] * scale + shift                                     # (14, 112)
            yw = jnp.maximum(yn[:, :HALF1], yn[:, HALF1:])                 # (14, 56) w-pool
            prows = [jnp.maximum(yw[2 * i:2 * i + 1, :], yw[2 * i + 1:2 * i + 2, :])
                     for i in range(P1)]
            p1 = jnp.concatenate(prows, axis=0)                            # (7, 56) h-pool
            xc2 = jnp.concatenate([p1[d:d + 4, :] for d in range(3)], axis=1)  # (4, 168)
            y2 = jnp.dot(xc2, w2, preferred_element_type=f32)              # (4, 64)
            y2 = jnp.maximum(y2 + b2, 0.0)
            y2w = jnp.maximum(y2[:, :HALF2], y2[:, HALF2:])                # (4, 32) w-pool
            r0 = jnp.maximum(y2w[0:1, :], y2w[1:2, :])                     # (1, 32)
            r1 = jnp.maximum(y2w[2:3, :], y2w[3:4, :])                     # (1, 32)
            feats.append(jnp.concatenate([r0, r1], axis=1))                # (1, 64)
        feat = jnp.concatenate(feats, axis=0)                              # (B, 64)

        # ---- fc1 + ReLU, fc2 (weights already transposed/permuted at init)
        h = jnp.maximum(jnp.dot(feat, f1w_ref[...], preferred_element_type=f32)
                        + f1b_ref[...], 0.0)                               # (B, 32)
        t = jnp.dot(h, f2w_ref[...], preferred_element_type=f32) + f2b_ref[...]  # (B, 24)

        # ---- STN parent-chain composition; single full-tile store
        comps = []
        cols = []
        for i in range(NUM_PARTS):
            a, bb, c, d, e, f = [t[:, 6 * i + k:6 * i + k + 1] for k in range(6)]
            if i != 0:
                pa, pb, pc, pd, pe, pf = comps[PARENTS[i]]
                a, bb, c, d, e, f = (a * pa + bb * pd,
                                     a * pb + bb * pe,
                                     a * pc + bb * pf + c,
                                     d * pa + e * pd,
                                     d * pb + e * pe,
                                     d * pc + e * pf + f)
            comps.append((a, bb, c, d, e, f))
            cols.extend([a, bb, c, d, e, f])
        o_ref[...] = jnp.concatenate(cols, axis=1)                         # (B, 24)

    return kernel


def net_forward(prep, x_nchw):
    B = x_nchw.shape[0]
    # One boundary re-layout of the (tiny) input: NCHW -> rows (b*H + h), cols (w*C + c)
    x2d = jnp.transpose(x_nchw, (0, 2, 3, 1)).reshape(
        B * IMAGE_SIZE, IMAGE_SIZE * IN_CHANNELS).astype(jnp.float32)
    args = (x2d, prep["w1_band"], prep["b1_t"], prep["gamma"], prep["beta"],
            prep["w2_band"], prep["b2_t"], prep["fc1_w"], prep["fc1_b"],
            prep["fc2_wT"], prep["fc2_b"])
    out = pl.pallas_call(
        _make_fused_kernel(B),
        out_shape=jax.ShapeDtypeStruct((B, FC2_OUT), jnp.float32),
        grid=(1,),
        in_specs=[_full_spec(a.shape) for a in args],
        out_specs=_full_spec((B, FC2_OUT)),
        compiler_params=pltpu.CompilerParams(dimension_semantics=("arbitrary",)),
    )(*args)
    return out.reshape(B, NUM_PARTS, 6)


# ---------------------------------------------------------------------------
# Pure-JAX reference (independent math) for correctness checking
# ---------------------------------------------------------------------------
def net_forward_ref(params, x):
    dn = ("NCHW", "OIHW", "NCHW")
    x = jax.lax.conv_general_dilated(x, params["conv1_w"], (1, 1), "VALID",
                                     dimension_numbers=dn)
    x = jnp.maximum(x + params["conv1_b"][None, :, None, None], 0.0)
    mean = jnp.mean(x, axis=(0, 2, 3), keepdims=True)
    var = jnp.mean((x - mean) ** 2, axis=(0, 2, 3), keepdims=True)
    x = ((x - mean) * jax.lax.rsqrt(var + BN_EPS) * params["bn_gamma"][None, :, None, None]
         + params["bn_beta"][None, :, None, None])
    x = jax.lax.reduce_window(x, -jnp.inf, jax.lax.max, (1, 1, 2, 2), (1, 1, 2, 2), "VALID")
    x = jax.lax.conv_general_dilated(x, params["conv2_w"], (1, 1), "VALID",
                                     dimension_numbers=dn)
    x = jnp.maximum(x + params["conv2_b"][None, :, None, None], 0.0)
    x = jax.lax.reduce_window(x, -jnp.inf, jax.lax.max, (1, 1, 2, 2), (1, 1, 2, 2), "VALID")
    x = x.reshape(x.shape[0], -1)
    x = jnp.maximum(x @ params["fc1_w"].T + params["fc1_b"], 0.0)
    t = x @ params["fc2_w"].T + params["fc2_b"]
    B = t.shape[0]
    last_row = jnp.tile(jnp.array([0.0, 0.0, 1.0], jnp.float32), (B,)).reshape(B, 1, 3)
    comps, outs = [], []
    for i in range(NUM_PARTS):
        pt = t[:, 6 * i:6 * i + 6].reshape(B, 2, 3)
        m = jnp.concatenate([pt, last_row], axis=1)
        if i != 0:
            m = jnp.matmul(m, comps[PARENTS[i]])
            pt = m[:, :2, :]
        comps.append(m)
        outs.append(pt.reshape(B, 6)[None])
    return jnp.transpose(jnp.concatenate(outs, axis=0), (1, 0, 2))


# ---------------------------------------------------------------------------
if __name__ == "__main__":
    params = init_params(jax.random.PRNGKey(1234))
    prep = prepare_params(params)
    x = jax.random.normal(jax.random.PRNGKey(0),
                          (2, IN_CHANNELS, IMAGE_SIZE, IMAGE_SIZE), jnp.float32)

    out = jax.block_until_ready(net_forward(prep, x))
    ref = jax.block_until_ready(net_forward_ref(params, x))

    assert out.shape == (2, NUM_PARTS, 6), out.shape
    assert bool(jnp.allclose(out, ref, rtol=2e-2, atol=2e-2)), "mismatch vs reference"
    print("KERNEL_OK")
</pallas_src>

<mosaic_0001>
module attributes {stable_mosaic.version = 11 : i64} {
  func.func @kernel(%arg0: i32, %arg1: memref<32x64xf32, #tpu.memory_space<vmem>>, %arg2: memref<192x112xf32, #tpu.memory_space<vmem>>, %arg3: memref<1x112xf32, #tpu.memory_space<vmem>>, %arg4: memref<1x8xf32, #tpu.memory_space<vmem>>, %arg5: memref<1x8xf32, #tpu.memory_space<vmem>>, %arg6: memref<168x64xf32, #tpu.memory_space<vmem>>, %arg7: memref<1x64xf32, #tpu.memory_space<vmem>>, %arg8: memref<64x32xf32, #tpu.memory_space<vmem>>, %arg9: memref<1x32xf32, #tpu.memory_space<vmem>>, %arg10: memref<32x24xf32, #tpu.memory_space<vmem>>, %arg11: memref<1x24xf32, #tpu.memory_space<vmem>>, %arg12: memref<2x24xf32, #tpu.memory_space<vmem>>) attributes {dimension_semantics = [#tpu.dimension_semantics<arbitrary>], iteration_bounds = array<i64: 1>, scalar_prefetch = 0 : i64, scratch_operands = 0 : i64, tpu.core_type = #tpu.core_type<tc>, window_params = [{pipeline_mode = #tpu.pipeline_mode<synchronous>, transform_indices = @transform_0, window_bounds = array<i64: 32, 64>}, {pipeline_mode = #tpu.pipeline_mode<synchronous>, transform_indices = @transform_1, window_bounds = array<i64: 192, 112>}, {pipeline_mode = #tpu.pipeline_mode<synchronous>, transform_indices = @transform_2, window_bounds = array<i64: 1, 112>}, {pipeline_mode = #tpu.pipeline_mode<synchronous>, transform_indices = @transform_3, window_bounds = array<i64: 1, 8>}, {pipeline_mode = #tpu.pipeline_mode<synchronous>, transform_indices = @transform_4, window_bounds = array<i64: 1, 8>}, {pipeline_mode = #tpu.pipeline_mode<synchronous>, transform_indices = @transform_5, window_bounds = array<i64: 168, 64>}, {pipeline_mode = #tpu.pipeline_mode<synchronous>, transform_indices = @transform_6, window_bounds = array<i64: 1, 64>}, {pipeline_mode = #tpu.pipeline_mode<synchronous>, transform_indices = @transform_7, window_bounds = array<i64: 64, 32>}, {pipeline_mode = #tpu.pipeline_mode<synchronous>, transform_indices = @transform_8, window_bounds = array<i64: 1, 32>}, {pipeline_mode = #tpu.pipeline_mode<synchronous>, transform_indices = @transform_9, window_bounds = array<i64: 32, 24>}, {pipeline_mode = #tpu.pipeline_mode<synchronous>, transform_indices = @transform_10, window_bounds = array<i64: 1, 24>}, {pipeline_mode = #tpu.pipeline_mode<synchronous>, transform_indices = @transform_11, window_bounds = array<i64: 2, 24>}]} {
    %c0 = arith.constant 0 : index
    %c0_0 = arith.constant 0 : index
    %0 = vector.load %arg2[%c0, %c0_0] : memref<192x112xf32, #tpu.memory_space<vmem>>, vector<192x112xf32>
    %c0_1 = arith.constant 0 : index
    %c0_2 = arith.constant 0 : index
    %1 = vector.load %arg3[%c0_1, %c0_2] : memref<1x112xf32, #tpu.memory_space<vmem>>, vector<1x112xf32>
    %c0_3 = arith.constant 0 : index
    %c0_4 = arith.constant 0 : index
    %2 = vector.load %arg6[%c0_3, %c0_4] : memref<168x64xf32, #tpu.memory_space<vmem>>, vector<168x64xf32>
    %c0_5 = arith.constant 0 : index
    %c0_6 = arith.constant 0 : index
    %3 = vector.load %arg7[%c0_5, %c0_6] : memref<1x64xf32, #tpu.memory_space<vmem>>, vector<1x64xf32>
    %c0_7 = arith.constant 0 : index
    %c0_8 = arith.constant 0 : index
    %4 = vector.load %arg4[%c0_7, %c0_8] : memref<1x8xf32, #tpu.memory_space<vmem>>, vector<1x8xf32>
    %c0_9 = arith.constant 0 : index
    %c0_10 = arith.constant 0 : index
    %5 = vector.load %arg5[%c0_9, %c0_10] : memref<1x8xf32, #tpu.memory_space<vmem>>, vector<1x8xf32>
    %c0_11 = arith.constant 0 : index
    %c0_12 = arith.constant 0 : index
    %6 = vector.load %arg1[%c0_11, %c0_12] : memref<32x64xf32, #tpu.memory_space<vmem>>, vector<14x64xf32>
    %c1 = arith.constant 1 : index
    %c0_13 = arith.constant 0 : index
    %7 = vector.load %arg1[%c1, %c0_13] : memref<32x64xf32, #tpu.memory_space<vmem>>, vector<14x64xf32>
    %c2 = arith.constant 2 : index
    %c0_14 = arith.constant 0 : index
    %8 = vector.load %arg1[%c2, %c0_14] : memref<32x64xf32, #tpu.memory_space<vmem>>, vector<14x64xf32>
    %9 = tpu.concatenate %6, %7, %8 in 1 : vector<14x64xf32>, vector<14x64xf32>, vector<14x64xf32> -> vector<14x192xf32>
    %cst = arith.constant dense<0.000000e+00> : vector<14x112xf32>
    %10 = tpu.matmul %9, %0, %cst {dimension_numbers = #tpu.dot_dimension_numbers<[1], [0], [0], [1], [0, 0, 1, 1], [], []>} : vector<14x192xf32>, vector<192x112xf32>, vector<14x112xf32> -> vector<14x112xf32>
    %11 = vector.broadcast %1 : vector<1x112xf32> to vector<14x112xf32>
    %12 = arith.addf %10, %11 : vector<14x112xf32>
    %cst_15 = arith.constant 0.000000e+00 : f32
    %13 = vector.broadcast %cst_15 : f32 to vector<14x112xf32>
    %14 = arith.maximumf %12, %13 : vector<14x112xf32>
    %c16 = arith.constant 16 : index
    %c0_16 = arith.constant 0 : index
    %15 = vector.load %arg1[%c16, %c0_16] : memref<32x64xf32, #tpu.memory_space<vmem>>, vector<14x64xf32>
    %c17 = arith.constant 17 : index
    %c0_17 = arith.constant 0 : index
    %16 = vector.load %arg1[%c17, %c0_17] : memref<32x64xf32, #tpu.memory_space<vmem>>, vector<14x64xf32>
    %c18 = arith.constant 18 : index
    %c0_18 = arith.constant 0 : index
    %17 = vector.load %arg1[%c18, %c0_18] : memref<32x64xf32, #tpu.memory_space<vmem>>, vector<14x64xf32>
    %18 = tpu.concatenate %15, %16, %17 in 1 : vector<14x64xf32>, vector<14x64xf32>, vector<14x64xf32> -> vector<14x192xf32>
    %cst_19 = arith.constant dense<0.000000e+00> : vector<14x112xf32>
    %19 = tpu.matmul %18, %0, %cst_19 {dimension_numbers = #tpu.dot_dimension_numbers<[1], [0], [0], [1], [0, 0, 1, 1], [], []>} : vector<14x192xf32>, vector<192x112xf32>, vector<14x112xf32> -> vector<14x112xf32>
    %20 = vector.broadcast %1 : vector<1x112xf32> to vector<14x112xf32>
    %21 = arith.addf %19, %20 : vector<14x112xf32>
    %cst_20 = arith.constant 0.000000e+00 : f32
    %22 = vector.broadcast %cst_20 : f32 to vector<14x112xf32>
    %23 = arith.maximumf %21, %22 : vector<14x112xf32>
    %cst_21 = arith.constant dense<0.000000e+00> : vector<112xf32>
    %24 = vector.multi_reduction <add>, %14, %cst_21 [0] : vector<14x112xf32> to vector<112xf32>
    %25 = vector.shape_cast %24 : vector<112xf32> to vector<1x112xf32>
    %cst_22 = arith.constant dense<0.000000e+00> : vector<112xf32>
    %26 = vector.multi_reduction <add>, %23, %cst_22 [0] : vector<14x112xf32> to vector<112xf32>
    %27 = vector.shape_cast %26 : vector<112xf32> to vector<1x112xf32>
    %28 = arith.addf %25, %27 : vector<1x112xf32>
    %29 = vector.extract_strided_slice %28 {offsets = [0, 0], sizes = [1, 8], strides = [1, 1]} : vector<1x112xf32> to vector<1x8xf32>
    %30 = vector.extract_strided_slice %28 {offsets = [0, 8], sizes = [1, 8], strides = [1, 1]} : vector<1x112xf32> to vector<1x8xf32>
    %31 = arith.addf %29, %30 : vector<1x8xf32>
    %32 = vector.extract_strided_slice %28 {offsets = [0, 16], sizes = [1, 8], strides = [1, 1]} : vector<1x112xf32> to vector<1x8xf32>
    %33 = arith.addf %31, %32 : vector<1x8xf32>
    %34 = vector.extract_strided_slice %28 {offsets = [0, 24], sizes = [1, 8], strides = [1, 1]} : vector<1x112xf32> to vector<1x8xf32>
    %35 = arith.addf %33, %34 : vector<1x8xf32>
    %36 = vector.extract_strided_slice %28 {offsets = [0, 32], sizes = [1, 8], strides = [1, 1]} : vector<1x112xf32> to vector<1x8xf32>
    %37 = arith.addf %35, %36 : vector<1x8xf32>
    %38 = vector.extract_strided_slice %28 {offsets = [0, 40], sizes = [1, 8], strides = [1, 1]} : vector<1x112xf32> to vector<1x8xf32>
    %39 = arith.addf %37, %38 : vector<1x8xf32>
    %40 = vector.extract_strided_slice %28 {offsets = [0, 48], sizes = [1, 8], strides = [1, 1]} : vector<1x112xf32> to vector<1x8xf32>
    %41 = arith.addf %39, %40 : vector<1x8xf32>
    %42 = vector.extract_strided_slice %28 {offsets = [0, 56], sizes = [1, 8], strides = [1, 1]} : vector<1x112xf32> to vector<1x8xf32>
    %43 = arith.addf %41, %42 : vector<1x8xf32>
    %44 = vector.extract_strided_slice %28 {offsets = [0, 64], sizes = [1, 8], strides = [1, 1]} : vector<1x112xf32> to vector<1x8xf32>
    %45 = arith.addf %43, %44 : vector<1x8xf32>
    %46 = vector.extract_strided_slice %28 {offsets = [0, 72], sizes = [1, 8], strides = [1, 1]} : vector<1x112xf32> to vector<1x8xf32>
    %47 = arith.addf %45, %46 : vector<1x8xf32>
    %48 = vector.extract_strided_slice %28 {offsets = [0, 80], sizes = [1, 8], strides = [1, 1]} : vector<1x112xf32> to vector<1x8xf32>
    %49 = arith.addf %47, %48 : vector<1x8xf32>
    %50 = vector.extract_strided_slice %28 {offsets = [0, 88], sizes = [1, 8], strides = [1, 1]} : vector<1x112xf32> to vector<1x8xf32>
    %51 = arith.addf %49, %50 : vector<1x8xf32>
    %52 = vector.extract_strided_slice %28 {offsets = [0, 96], sizes = [1, 8], strides = [1, 1]} : vector<1x112xf32> to vector<1x8xf32>
    %53 = arith.addf %51, %52 : vector<1x8xf32>
    %54 = vector.extract_strided_slice %28 {offsets = [0, 104], sizes = [1, 8], strides = [1, 1]} : vector<1x112xf32> to vector<1x8xf32>
    %55 = arith.addf %53, %54 : vector<1x8xf32>
    %cst_23 = arith.constant 3.920000e+02 : f32
    %56 = vector.broadcast %cst_23 : f32 to vector<1x8xf32>
    %57 = arith.divf %55, %56 : vector<1x8xf32>
    %58 = tpu.concatenate %57, %57, %57, %57, %57, %57, %57, %57, %57, %57, %57, %57, %57, %57 in 1 : vector<1x8xf32>, vector<1x8xf32>, vector<1x8xf32>, vector<1x8xf32>, vector<1x8xf32>, vector<1x8xf32>, vector<1x8xf32>, vector<1x8xf32>, vector<1x8xf32>, vector<1x8xf32>, vector<1x8xf32>, vector<1x8xf32>, vector<1x8xf32>, vector<1x8xf32> -> vector<1x112xf32>
    %59 = vector.broadcast %58 : vector<1x112xf32> to vector<14x112xf32>
    %60 = arith.subf %14, %59 : vector<14x112xf32>
    %61 = arith.mulf %60, %60 : vector<14x112xf32>
    %cst_24 = arith.constant dense<0.000000e+00> : vector<112xf32>
    %62 = vector.multi_reduction <add>, %61, %cst_24 [0] : vector<14x112xf32> to vector<112xf32>
    %63 = vector.shape_cast %62 : vector<112xf32> to vector<1x112xf32>
    %64 = vector.broadcast %58 : vector<1x112xf32> to vector<14x112xf32>
    %65 = arith.subf %23, %64 : vector<14x112xf32>
    %66 = arith.mulf %65, %65 : vector<14x112xf32>
    %cst_25 = arith.constant dense<0.000000e+00> : vector<112xf32>
    %67 = vector.multi_reduction <add>, %66, %cst_25 [0] : vector<14x112xf32> to vector<112xf32>
    %68 = vector.shape_cast %67 : vector<112xf32> to vector<1x112xf32>
    %69 = arith.addf %63, %68 : vector<1x112xf32>
    %70 = vector.extract_strided_slice %69 {offsets = [0, 0], sizes = [1, 8], strides = [1, 1]} : vector<1x112xf32> to vector<1x8xf32>
    %71 = vector.extract_strided_slice %69 {offsets = [0, 8], sizes = [1, 8], strides = [1, 1]} : vector<1x112xf32> to vector<1x8xf32>
    %72 = arith.addf %70, %71 : vector<1x8xf32>
    %73 = vector.extract_strided_slice %69 {offsets = [0, 16], sizes = [1, 8], strides = [1, 1]} : vector<1x112xf32> to vector<1x8xf32>
    %74 = arith.addf %72, %73 : vector<1x8xf32>
    %75 = vector.extract_strided_slice %69 {offsets = [0, 24], sizes = [1, 8], strides = [1, 1]} : vector<1x112xf32> to vector<1x8xf32>
    %76 = arith.addf %74, %75 : vector<1x8xf32>
    %77 = vector.extract_strided_slice %69 {offsets = [0, 32], sizes = [1, 8], strides = [1, 1]} : vector<1x112xf32> to vector<1x8xf32>
    %78 = arith.addf %76, %77 : vector<1x8xf32>
    %79 = vector.extract_strided_slice %69 {offsets = [0, 40], sizes = [1, 8], strides = [1, 1]} : vector<1x112xf32> to vector<1x8xf32>
    %80 = arith.addf %78, %79 : vector<1x8xf32>
    %81 = vector.extract_strided_slice %69 {offsets = [0, 48], sizes = [1, 8], strides = [1, 1]} : vector<1x112xf32> to vector<1x8xf32>
    %82 = arith.addf %80, %81 : vector<1x8xf32>
    %83 = vector.extract_strided_slice %69 {offsets = [0, 56], sizes = [1, 8], strides = [1, 1]} : vector<1x112xf32> to vector<1x8xf32>
    %84 = arith.addf %82, %83 : vector<1x8xf32>
    %85 = vector.extract_strided_slice %69 {offsets = [0, 64], sizes = [1, 8], strides = [1, 1]} : vector<1x112xf32> to vector<1x8xf32>
    %86 = arith.addf %84, %85 : vector<1x8xf32>
    %87 = vector.extract_strided_slice %69 {offsets = [0, 72], sizes = [1, 8], strides = [1, 1]} : vector<1x112xf32> to vector<1x8xf32>
    %88 = arith.addf %86, %87 : vector<1x8xf32>
    %89 = vector.extract_strided_slice %69 {offsets = [0, 80], sizes = [1, 8], strides = [1, 1]} : vector<1x112xf32> to vector<1x8xf32>
    %90 = arith.addf %88, %89 : vector<1x8xf32>
    %91 = vector.extract_strided_slice %69 {offsets = [0, 88], sizes = [1, 8], strides = [1, 1]} : vector<1x112xf32> to vector<1x8xf32>
    %92 = arith.addf %90, %91 : vector<1x8xf32>
    %93 = vector.extract_strided_slice %69 {offsets = [0, 96], sizes = [1, 8], strides = [1, 1]} : vector<1x112xf32> to vector<1x8xf32>
    %94 = arith.addf %92, %93 : vector<1x8xf32>
    %95 = vector.extract_strided_slice %69 {offsets = [0, 104], sizes = [1, 8], strides = [1, 1]} : vector<1x112xf32> to vector<1x8xf32>
    %96 = arith.addf %94, %95 : vector<1x8xf32>
    %cst_26 = arith.constant 3.920000e+02 : f32
    %97 = vector.broadcast %cst_26 : f32 to vector<1x8xf32>
    %98 = arith.divf %96, %97 : vector<1x8xf32>
    %cst_27 = arith.constant 9.99999974E-6 : f32
    %99 = vector.broadcast %cst_27 : f32 to vector<1x8xf32>
    %100 = arith.addf %98, %99 : vector<1x8xf32>
    %101 = math.rsqrt %100 : vector<1x8xf32>
    %102 = arith.mulf %101, %4 : vector<1x8xf32>
    %103 = arith.mulf %57, %102 : vector<1x8xf32>
    %104 = arith.subf %5, %103 : vector<1x8xf32>
    %105 = tpu.concatenate %102, %102, %102, %102, %102, %102, %102, %102, %102, %102, %102, %102, %102, %102 in 1 : vector<1x8xf32>, vector<1x8xf32>, vector<1x8xf32>, vector<1x8xf32>, vector<1x8xf32>, vector<1x8xf32>, vector<1x8xf32>, vector<1x8xf32>, vector<1x8xf32>, vector<1x8xf32>, vector<1x8xf32>, vector<1x8xf32>, vector<1x8xf32>, vector<1x8xf32> -> vector<1x112xf32>
    %106 = tpu.concatenate %104, %104, %104, %104, %104, %104, %104, %104, %104, %104, %104, %104, %104, %104 in 1 : vector<1x8xf32>, vector<1x8xf32>, vector<1x8xf32>, vector<1x8xf32>, vector<1x8xf32>, vector<1x8xf32>, vector<1x8xf32>, vector<1x8xf32>, vector<1x8xf32>, vector<1x8xf32>, vector<1x8xf32>, vector<1x8xf32>, vector<1x8xf32>, vector<1x8xf32> -> vector<1x112xf32>
    %107 = vector.broadcast %105 : vector<1x112xf32> to vector<14x112xf32>
    %108 = arith.mulf %14, %107 : vector<14x112xf32>
    %109 = vector.broadcast %106 : vector<1x112xf32> to vector<14x112xf32>
    %110 = arith.addf %108, %109 : vector<14x112xf32>
    %111 = vector.extract_strided_slice %110 {offsets = [0, 0], sizes = [14, 56], strides = [1, 1]} : vector<14x112xf32> to vector<14x56xf32>
    %112 = vector.extract_strided_slice %110 {offsets = [0, 56], sizes = [14, 56], strides = [1, 1]} : vector<14x112xf32> to vector<14x56xf32>
    %113 = arith.maximumf %111, %112 : vector<14x56xf32>
    %114 = vector.extract_strided_slice %113 {offsets = [0, 0], sizes = [1, 56], strides = [1, 1]} : vector<14x56xf32> to vector<1x56xf32>
    %115 = vector.extract_strided_slice %113 {offsets = [1, 0], sizes = [1, 56], strides = [1, 1]} : vector<14x56xf32> to vector<1x56xf32>
    %116 = arith.maximumf %114, %115 : vector<1x56xf32>
    %117 = vector.extract_strided_slice %113 {offsets = [2, 0], sizes = [1, 56], strides = [1, 1]} : vector<14x56xf32> to vector<1x56xf32>
    %118 = vector.extract_strided_slice %113 {offsets = [3, 0], sizes = [1, 56], strides = [1, 1]} : vector<14x56xf32> to vector<1x56xf32>
    %119 = arith.maximumf %117, %118 : vector<1x56xf32>
    %120 = vector.extract_strided_slice %113 {offsets = [4, 0], sizes = [1, 56], strides = [1, 1]} : vector<14x56xf32> to vector<1x56xf32>
    %121 = vector.extract_strided_slice %113 {offsets = [5, 0], sizes = [1, 56], strides = [1, 1]} : vector<14x56xf32> to vector<1x56xf32>
    %122 = arith.maximumf %120, %121 : vector<1x56xf32>
    %123 = vector.extract_strided_slice %113 {offsets = [6, 0], sizes = [1, 56], strides = [1, 1]} : vector<14x56xf32> to vector<1x56xf32>
    %124 = vector.extract_strided_slice %113 {offsets = [7, 0], sizes = [1, 56], strides = [1, 1]} : vector<14x56xf32> to vector<1x56xf32>
    %125 = arith.maximumf %123, %124 : vector<1x56xf32>
    %126 = vector.extract_strided_slice %113 {offsets = [8, 0], sizes = [1, 56], strides = [1, 1]} : vector<14x56xf32> to vector<1x56xf32>
    %127 = vector.extract_strided_slice %113 {offsets = [9, 0], sizes = [1, 56], strides = [1, 1]} : vector<14x56xf32> to vector<1x56xf32>
    %128 = arith.maximumf %126, %127 : vector<1x56xf32>
    %129 = vector.extract_strided_slice %113 {offsets = [10, 0], sizes = [1, 56], strides = [1, 1]} : vector<14x56xf32> to vector<1x56xf32>
    %130 = vector.extract_strided_slice %113 {offsets = [11, 0], sizes = [1, 56], strides = [1, 1]} : vector<14x56xf32> to vector<1x56xf32>
    %131 = arith.maximumf %129, %130 : vector<1x56xf32>
    %132 = vector.extract_strided_slice %113 {offsets = [12, 0], sizes = [1, 56], strides = [1, 1]} : vector<14x56xf32> to vector<1x56xf32>
    %133 = vector.extract_strided_slice %113 {offsets = [13, 0], sizes = [1, 56], strides = [1, 1]} : vector<14x56xf32> to vector<1x56xf32>
    %134 = arith.maximumf %132, %133 : vector<1x56xf32>
    %135 = tpu.concatenate %116, %119, %122, %125, %128, %131, %134 in 0 : vector<1x56xf32>, vector<1x56xf32>, vector<1x56xf32>, vector<1x56xf32>, vector<1x56xf32>, vector<1x56xf32>, vector<1x56xf32> -> vector<7x56xf32>
    %136 = vector.extract_strided_slice %135 {offsets = [0, 0], sizes = [4, 56], strides = [1, 1]} : vector<7x56xf32> to vector<4x56xf32>
    %137 = vector.extract_strided_slice %135 {offsets = [1, 0], sizes = [4, 56], strides = [1, 1]} : vector<7x56xf32> to vector<4x56xf32>
    %138 = vector.extract_strided_slice %135 {offsets = [2, 0], sizes = [4, 56], strides = [1, 1]} : vector<7x56xf32> to vector<4x56xf32>
    %139 = tpu.concatenate %136, %137, %138 in 1 : vector<4x56xf32>, vector<4x56xf32>, vector<4x56xf32> -> vector<4x168xf32>
    %cst_28 = arith.constant dense<0.000000e+00> : vector<4x64xf32>
    %140 = tpu.matmul %139, %2, %cst_28 {dimension_numbers = #tpu.dot_dimension_numbers<[1], [0], [0], [1], [0, 0, 1, 1], [], []>} : vector<4x168xf32>, vector<168x64xf32>, vector<4x64xf32> -> vector<4x64xf32>
    %141 = vector.broadcast %3 : vector<1x64xf32> to vector<4x64xf32>
    %142 = arith.addf %140, %141 : vector<4x64xf32>
    %cst_29 = arith.constant 0.000000e+00 : f32
    %143 = vector.broadcast %cst_29 : f32 to vector<4x64xf32>
    %144 = arith.maximumf %142, %143 : vector<4x64xf32>
    %145 = vector.extract_strided_slice %144 {offsets = [0, 0], sizes = [4, 32], strides = [1, 1]} : vector<4x64xf32> to vector<4x32xf32>
    %146 = vector.extract_strided_slice %144 {offsets = [0, 32], sizes = [4, 32], strides = [1, 1]} : vector<4x64xf32> to vector<4x32xf32>
    %147 = arith.maximumf %145, %146 : vector<4x32xf32>
    %148 = vector.extract_strided_slice %147 {offsets = [0, 0], sizes = [1, 32], strides = [1, 1]} : vector<4x32xf32> to vector<1x32xf32>
    %149 = vector.extract_strided_slice %147 {offsets = [1, 0], sizes = [1, 32], strides = [1, 1]} : vector<4x32xf32> to vector<1x32xf32>
    %150 = arith.maximumf %148, %149 : vector<1x32xf32>
    %151 = vector.extract_strided_slice %147 {offsets = [2, 0], sizes = [1, 32], strides = [1, 1]} : vector<4x32xf32> to vector<1x32xf32>
    %152 = vector.extract_strided_slice %147 {offsets = [3, 0], sizes = [1, 32], strides = [1, 1]} : vector<4x32xf32> to vector<1x32xf32>
    %153 = arith.maximumf %151, %152 : vector<1x32xf32>
    %154 = tpu.concatenate %150, %153 in 1 : vector<1x32xf32>, vector<1x32xf32> -> vector<1x64xf32>
    %155 = vector.broadcast %105 : vector<1x112xf32> to vector<14x112xf32>
    %156 = arith.mulf %23, %155 : vector<14x112xf32>
    %157 = vector.broadcast %106 : vector<1x112xf32> to vector<14x112xf32>
    %158 = arith.addf %156, %157 : vector<14x112xf32>
    %159 = vector.extract_strided_slice %158 {offsets = [0, 0], sizes = [14, 56], strides = [1, 1]} : vector<14x112xf32> to vector<14x56xf32>
    %160 = vector.extract_strided_slice %158 {offsets = [0, 56], sizes = [14, 56], strides = [1, 1]} : vector<14x112xf32> to vector<14x56xf32>
    %161 = arith.maximumf %159, %160 : vector<14x56xf32>
    %162 = vector.extract_strided_slice %161 {offsets = [0, 0], sizes = [1, 56], strides = [1, 1]} : vector<14x56xf32> to vector<1x56xf32>
    %163 = vector.extract_strided_slice %161 {offsets = [1, 0], sizes = [1, 56], strides = [1, 1]} : vector<14x56xf32> to vector<1x56xf32>
    %164 = arith.maximumf %162, %163 : vector<1x56xf32>
    %165 = vector.extract_strided_slice %161 {offsets = [2, 0], sizes = [1, 56], strides = [1, 1]} : vector<14x56xf32> to vector<1x56xf32>
    %166 = vector.extract_strided_slice %161 {offsets = [3, 0], sizes = [1, 56], strides = [1, 1]} : vector<14x56xf32> to vector<1x56xf32>
    %167 = arith.maximumf %165, %166 : vector<1x56xf32>
    %168 = vector.extract_strided_slice %161 {offsets = [4, 0], sizes = [1, 56], strides = [1, 1]} : vector<14x56xf32> to vector<1x56xf32>
    %169 = vector.extract_strided_slice %161 {offsets = [5, 0], sizes = [1, 56], strides = [1, 1]} : vector<14x56xf32> to vector<1x56xf32>
    %170 = arith.maximumf %168, %169 : vector<1x56xf32>
    %171 = vector.extract_strided_slice %161 {offsets = [6, 0], sizes = [1, 56], strides = [1, 1]} : vector<14x56xf32> to vector<1x56xf32>
    %172 = vector.extract_strided_slice %161 {offsets = [7, 0], sizes = [1, 56], strides = [1, 1]} : vector<14x56xf32> to vector<1x56xf32>
    %173 = arith.maximumf %171, %172 : vector<1x56xf32>
    %174 = vector.extract_strided_slice %161 {offsets = [8, 0], sizes = [1, 56], strides = [1, 1]} : vector<14x56xf32> to vector<1x56xf32>
    %175 = vector.extract_strided_slice %161 {offsets = [9, 0], sizes = [1, 56], strides = [1, 1]} : vector<14x56xf32> to vector<1x56xf32>
    %176 = arith.maximumf %174, %175 : vector<1x56xf32>
    %177 = vector.extract_strided_slice %161 {offsets = [10, 0], sizes = [1, 56], strides = [1, 1]} : vector<14x56xf32> to vector<1x56xf32>
    %178 = vector.extract_strided_slice %161 {offsets = [11, 0], sizes = [1, 56], strides = [1, 1]} : vector<14x56xf32> to vector<1x56xf32>
    %179 = arith.maximumf %177, %178 : vector<1x56xf32>
    %180 = vector.extract_strided_slice %161 {offsets = [12, 0], sizes = [1, 56], strides = [1, 1]} : vector<14x56xf32> to vector<1x56xf32>
    %181 = vector.extract_strided_slice %161 {offsets = [13, 0], sizes = [1, 56], strides = [1, 1]} : vector<14x56xf32> to vector<1x56xf32>
    %182 = arith.maximumf %180, %181 : vector<1x56xf32>
    %183 = tpu.concatenate %164, %167, %170, %173, %176, %179, %182 in 0 : vector<1x56xf32>, vector<1x56xf32>, vector<1x56xf32>, vector<1x56xf32>, vector<1x56xf32>, vector<1x56xf32>, vector<1x56xf32> -> vector<7x56xf32>
    %184 = vector.extract_strided_slice %183 {offsets = [0, 0], sizes = [4, 56], strides = [1, 1]} : vector<7x56xf32> to vector<4x56xf32>
    %185 = vector.extract_strided_slice %183 {offsets = [1, 0], sizes = [4, 56], strides = [1, 1]} : vector<7x56xf32> to vector<4x56xf32>
    %186 = vector.extract_strided_slice %183 {offsets = [2, 0], sizes = [4, 56], strides = [1, 1]} : vector<7x56xf32> to vector<4x56xf32>
    %187 = tpu.concatenate %184, %185, %186 in 1 : vector<4x56xf32>, vector<4x56xf32>, vector<4x56xf32> -> vector<4x168xf32>
    %cst_30 = arith.constant dense<0.000000e+00> : vector<4x64xf32>
    %188 = tpu.matmul %187, %2, %cst_30 {dimension_numbers = #tpu.dot_dimension_numbers<[1], [0], [0], [1], [0, 0, 1, 1], [], []>} : vector<4x168xf32>, vector<168x64xf32>, vector<4x64xf32> -> vector<4x64xf32>
    %189 = vector.broadcast %3 : vector<1x64xf32> to vector<4x64xf32>
    %190 = arith.addf %188, %189 : vector<4x64xf32>
    %cst_31 = arith.constant 0.000000e+00 : f32
    %191 = vector.broadcast %cst_31 : f32 to vector<4x64xf32>
    %192 = arith.maximumf %190, %191 : vector<4x64xf32>
    %193 = vector.extract_strided_slice %192 {offsets = [0, 0], sizes = [4, 32], strides = [1, 1]} : vector<4x64xf32> to vector<4x32xf32>
    %194 = vector.extract_strided_slice %192 {offsets = [0, 32], sizes = [4, 32], strides = [1, 1]} : vector<4x64xf32> to vector<4x32xf32>
    %195 = arith.maximumf %193, %194 : vector<4x32xf32>
    %196 = vector.extract_strided_slice %195 {offsets = [0, 0], sizes = [1, 32], strides = [1, 1]} : vector<4x32xf32> to vector<1x32xf32>
    %197 = vector.extract_strided_slice %195 {offsets = [1, 0], sizes = [1, 32], strides = [1, 1]} : vector<4x32xf32> to vector<1x32xf32>
    %198 = arith.maximumf %196, %197 : vector<1x32xf32>
    %199 = vector.extract_strided_slice %195 {offsets = [2, 0], sizes = [1, 32], strides = [1, 1]} : vector<4x32xf32> to vector<1x32xf32>
    %200 = vector.extract_strided_slice %195 {offsets = [3, 0], sizes = [1, 32], strides = [1, 1]} : vector<4x32xf32> to vector<1x32xf32>
    %201 = arith.maximumf %199, %200 : vector<1x32xf32>
    %202 = tpu.concatenate %198, %201 in 1 : vector<1x32xf32>, vector<1x32xf32> -> vector<1x64xf32>
    %203 = tpu.concatenate %154, %202 in 0 : vector<1x64xf32>, vector<1x64xf32> -> vector<2x64xf32>
    %c0_32 = arith.constant 0 : index
    %c0_33 = arith.constant 0 : index
    %204 = vector.load %arg8[%c0_32, %c0_33] : memref<64x32xf32, #tpu.memory_space<vmem>>, vector<64x32xf32>
    %cst_34 = arith.constant dense<0.000000e+00> : vector<2x32xf32>
    %205 = tpu.matmul %203, %204, %cst_34 {dimension_numbers = #tpu.dot_dimension_numbers<[1], [0], [0], [1], [0, 0, 1, 1], [], []>} : vector<2x64xf32>, vector<64x32xf32>, vector<2x32xf32> -> vector<2x32xf32>
    %c0_35 = arith.constant 0 : index
    %c0_36 = arith.constant 0 : index
    %206 = vector.load %arg9[%c0_35, %c0_36] : memref<1x32xf32, #tpu.memory_space<vmem>>, vector<1x32xf32>
    %207 = vector.broadcast %206 : vector<1x32xf32> to vector<2x32xf32>
    %208 = arith.addf %205, %207 : vector<2x32xf32>
    %cst_37 = arith.constant 0.000000e+00 : f32
    %209 = vector.broadcast %cst_37 : f32 to vector<2x32xf32>
    %210 = arith.maximumf %208, %209 : vector<2x32xf32>
    %c0_38 = arith.constant 0 : index
    %c0_39 = arith.constant 0 : index
    %211 = vector.load %arg10[%c0_38, %c0_39] : memref<32x24xf32, #tpu.memory_space<vmem>>, vector<32x24xf32>
    %cst_40 = arith.constant dense<0.000000e+00> : vector<2x24xf32>
    %212 = tpu.matmul %210, %211, %cst_40 {dimension_numbers = #tpu.dot_dimension_numbers<[1], [0], [0], [1], [0, 0, 1, 1], [], []>} : vector<2x32xf32>, vector<32x24xf32>, vector<2x24xf32> -> vector<2x24xf32>
    %c0_41 = arith.constant 0 : index
    %c0_42 = arith.constant 0 : index
    %213 = vector.load %arg11[%c0_41, %c0_42] : memref<1x24xf32, #tpu.memory_space<vmem>>, vector<1x24xf32>
    %214 = vector.broadcast %213 : vector<1x24xf32> to vector<2x24xf32>
    %215 = arith.addf %212, %214 : vector<2x24xf32>
    %216 = vector.extract_strided_slice %215 {offsets = [0, 0], sizes = [2, 1], strides = [1, 1]} : vector<2x24xf32> to vector<2x1xf32>
    %217 = vector.extract_strided_slice %215 {offsets = [0, 1], sizes = [2, 1], strides = [1, 1]} : vector<2x24xf32> to vector<2x1xf32>
    %218 = vector.extract_strided_slice %215 {offsets = [0, 2], sizes = [2, 1], strides = [1, 1]} : vector<2x24xf32> to vector<2x1xf32>
    %219 = vector.extract_strided_slice %215 {offsets = [0, 3], sizes = [2, 1], strides = [1, 1]} : vector<2x24xf32> to vector<2x1xf32>
    %220 = vector.extract_strided_slice %215 {offsets = [0, 4], sizes = [2, 1], strides = [1, 1]} : vector<2x24xf32> to vector<2x1xf32>
    %221 = vector.extract_strided_slice %215 {offsets = [0, 5], sizes = [2, 1], strides = [1, 1]} : vector<2x24xf32> to vector<2x1xf32>
    %222 = vector.extract_strided_slice %215 {offsets = [0, 6], sizes = [2, 1], strides = [1, 1]} : vector<2x24xf32> to vector<2x1xf32>
    %223 = vector.extract_strided_slice %215 {offsets = [0, 7], sizes = [2, 1], strides = [1, 1]} : vector<2x24xf32> to vector<2x1xf32>
    %224 = vector.extract_strided_slice %215 {offsets = [0, 8], sizes = [2, 1], strides = [1, 1]} : vector<2x24xf32> to vector<2x1xf32>
    %225 = vector.extract_strided_slice %215 {offsets = [0, 9], sizes = [2, 1], strides = [1, 1]} : vector<2x24xf32> to vector<2x1xf32>
    %226 = vector.extract_strided_slice %215 {offsets = [0, 10], sizes = [2, 1], strides = [1, 1]} : vector<2x24xf32> to vector<2x1xf32>
    %227 = vector.extract_strided_slice %215 {offsets = [0, 11], sizes = [2, 1], strides = [1, 1]} : vector<2x24xf32> to vector<2x1xf32>
    %228 = arith.mulf %222, %216 : vector<2x1xf32>
    %229 = arith.mulf %223, %219 : vector<2x1xf32>
    %230 = arith.addf %228, %229 : vector<2x1xf32>
    %231 = arith.mulf %222, %217 : vector<2x1xf32>
    %232 = arith.mulf %223, %220 : vector<2x1xf32>
    %233 = arith.addf %231, %232 : vector<2x1xf32>
    %234 = arith.mulf %222, %218 : vector<2x1xf32>
    %235 = arith.mulf %223, %221 : vector<2x1xf32>
    %236 = arith.addf %234, %235 : vector<2x1xf32>
    %237 = arith.addf %236, %224 : vector<2x1xf32>
    %238 = arith.mulf %225, %216 : vector<2x1xf32>
    %239 = arith.mulf %226, %219 : vector<2x1xf32>
    %240 = arith.addf %238, %239 : vector<2x1xf32>
    %241 = arith.mulf %225, %217 : vector<2x1xf32>
    %242 = arith.mulf %226, %220 : vector<2x1xf32>
    %243 = arith.addf %241, %242 : vector<2x1xf32>
    %244 = arith.mulf %225, %218 : vector<2x1xf32>
    %245 = arith.mulf %226, %221 : vector<2x1xf32>
    %246 = arith.addf %244, %245 : vector<2x1xf32>
    %247 = arith.addf %246, %227 : vector<2x1xf32>
    %248 = vector.extract_strided_slice %215 {offsets = [0, 12], sizes = [2, 1], strides = [1, 1]} : vector<2x24xf32> to vector<2x1xf32>
    %249 = vector.extract_strided_slice %215 {offsets = [0, 13], sizes = [2, 1], strides = [1, 1]} : vector<2x24xf32> to vector<2x1xf32>
    %250 = vector.extract_strided_slice %215 {offsets = [0, 14], sizes = [2, 1], strides = [1, 1]} : vector<2x24xf32> to vector<2x1xf32>
    %251 = vector.extract_strided_slice %215 {offsets = [0, 15], sizes = [2, 1], strides = [1, 1]} : vector<2x24xf32> to vector<2x1xf32>
    %252 = vector.extract_strided_slice %215 {offsets = [0, 16], sizes = [2, 1], strides = [1, 1]} : vector<2x24xf32> to vector<2x1xf32>
    %253 = vector.extract_strided_slice %215 {offsets = [0, 17], sizes = [2, 1], strides = [1, 1]} : vector<2x24xf32> to vector<2x1xf32>
    %254 = arith.mulf %248, %216 : vector<2x1xf32>
    %255 = arith.mulf %249, %219 : vector<2x1xf32>
    %256 = arith.addf %254, %255 : vector<2x1xf32>
    %257 = arith.mulf %248, %217 : vector<2x1xf32>
    %258 = arith.mulf %249, %220 : vector<2x1xf32>
    %259 = arith.addf %257, %258 : vector<2x1xf32>
    %260 = arith.mulf %248, %218 : vector<2x1xf32>
    %261 = arith.mulf %249, %221 : vector<2x1xf32>
    %262 = arith.addf %260, %261 : vector<2x1xf32>
    %263 = arith.addf %262, %250 : vector<2x1xf32>
    %264 = arith.mulf %251, %216 : vector<2x1xf32>
    %265 = arith.mulf %252, %219 : vector<2x1xf32>
    %266 = arith.addf %264, %265 : vector<2x1xf32>
    %267 = arith.mulf %251, %217 : vector<2x1xf32>
    %268 = arith.mulf %252, %220 : vector<2x1xf32>
    %269 = arith.addf %267, %268 : vector<2x1xf32>
    %270 = arith.mulf %251, %218 : vector<2x1xf32>
    %271 = arith.mulf %252, %221 : vector<2x1xf32>
    %272 = arith.addf %270, %271 : vector<2x1xf32>
    %273 = arith.addf %272, %253 : vector<2x1xf32>
    %274 = vector.extract_strided_slice %215 {offsets = [0, 18], sizes = [2, 1], strides = [1, 1]} : vector<2x24xf32> to vector<2x1xf32>
    %275 = vector.extract_strided_slice %215 {offsets = [0, 19], sizes = [2, 1], strides = [1, 1]} : vector<2x24xf32> to vector<2x1xf32>
    %276 = vector.extract_strided_slice %215 {offsets = [0, 20], sizes = [2, 1], strides = [1, 1]} : vector<2x24xf32> to vector<2x1xf32>
    %277 = vector.extract_strided_slice %215 {offsets = [0, 21], sizes = [2, 1], strides = [1, 1]} : vector<2x24xf32> to vector<2x1xf32>
    %278 = vector.extract_strided_slice %215 {offsets = [0, 22], sizes = [2, 1], strides = [1, 1]} : vector<2x24xf32> to vector<2x1xf32>
    %279 = vector.extract_strided_slice %215 {offsets = [0, 23], sizes = [2, 1], strides = [1, 1]} : vector<2x24xf32> to vector<2x1xf32>
    %280 = arith.mulf %274, %256 : vector<2x1xf32>
    %281 = arith.mulf %275, %266 : vector<2x1xf32>
    %282 = arith.addf %280, %281 : vector<2x1xf32>
    %283 = arith.mulf %274, %259 : vector<2x1xf32>
    %284 = arith.mulf %275, %269 : vector<2x1xf32>
    %285 = arith.addf %283, %284 : vector<2x1xf32>
    %286 = arith.mulf %274, %263 : vector<2x1xf32>
    %287 = arith.mulf %275, %273 : vector<2x1xf32>
    %288 = arith.addf %286, %287 : vector<2x1xf32>
    %289 = arith.addf %288, %276 : vector<2x1xf32>
    %290 = arith.mulf %277, %256 : vector<2x1xf32>
    %291 = arith.mulf %278, %266 : vector<2x1xf32>
    %292 = arith.addf %290, %291 : vector<2x1xf32>
    %293 = arith.mulf %277, %259 : vector<2x1xf32>
    %294 = arith.mulf %278, %269 : vector<2x1xf32>
    %295 = arith.addf %293, %294 : vector<2x1xf32>
    %296 = arith.mulf %277, %263 : vector<2x1xf32>
    %297 = arith.mulf %278, %273 : vector<2x1xf32>
    %298 = arith.addf %296, %297 : vector<2x1xf32>
    %299 = arith.addf %298, %279 : vector<2x1xf32>
    %300 = tpu.concatenate %216, %217, %218, %219, %220, %221, %230, %233, %237, %240, %243, %247, %256, %259, %263, %266 in 1 : vector<2x1xf32>, vector<2x1xf32>, vector<2x1xf32>, vector<2x1xf32>, vector<2x1xf32>, vector<2x1xf32>, vector<2x1xf32>, vector<2x1xf32>, vector<2x1xf32>, vector<2x1xf32>, vector<2x1xf32>, vector<2x1xf32>, vector<2x1xf32>, vector<2x1xf32>, vector<2x1xf32>, vector<2x1xf32> -> vector<2x16xf32>
    %301 = tpu.concatenate %269, %273, %282, %285, %289, %292, %295, %299 in 1 : vector<2x1xf32>, vector<2x1xf32>, vector<2x1xf32>, vector<2x1xf32>, vector<2x1xf32>, vector<2x1xf32>, vector<2x1xf32>, vector<2x1xf32> -> vector<2x8xf32>
    %302 = tpu.concatenate %300, %301 in 1 : vector<2x16xf32>, vector<2x8xf32> -> vector<2x24xf32>
    %c0_43 = arith.constant 0 : index
    %c0_44 = arith.constant 0 : index
    %303 = vector.load %arg12[%c0_43, %c0_44] : memref<2x24xf32, #tpu.memory_space<vmem>>, vector<2x24xf32>
    tpu.vector_store %arg12[%c0_43, %c0_44], %302 {strides = array<i32>} : memref<2x24xf32, #tpu.memory_space<vmem>>, vector<2x24xf32>,
    return
  }
  func.func @transform_0(%arg0: i32) -> (i32, i32) {
    %c0_i32 = arith.constant 0 : i32
    %c0_i32_0 = arith.constant 0 : i32
    %c0_i32_1 = arith.constant 0 : i32
    return %c0_i32, %c0_i32_0 : i32, i32
  }
  func.func @transform_1(%arg0: i32) -> (i32, i32) {
    %c0_i32 = arith.constant 0 : i32
    %c0_i32_0 = arith.constant 0 : i32
    %c0_i32_1 = arith.constant 0 : i32
    return %c0_i32, %c0_i32_0 : i32, i32
  }
  func.func @transform_2(%arg0: i32) -> (i32, i32) {
    %c0_i32 = arith.constant 0 : i32
    %c0_i32_0 = arith.constant 0 : i32
    %c0_i32_1 = arith.constant 0 : i32
    return %c0_i32, %c0_i32_0 : i32, i32
  }
  func.func @transform_3(%arg0: i32) -> (i32, i32) {
    %c0_i32 = arith.constant 0 : i32
    %c0_i32_0 = arith.constant 0 : i32
    %c0_i32_1 = arith.constant 0 : i32
    return %c0_i32, %c0_i32_0 : i32, i32
  }
  func.func @transform_4(%arg0: i32) -> (i32, i32) {
    %c0_i32 = arith.constant 0 : i32
    %c0_i32_0 = arith.constant 0 : i32
    %c0_i32_1 = arith.constant 0 : i32
    return %c0_i32, %c0_i32_0 : i32, i32
  }
  func.func @transform_5(%arg0: i32) -> (i32, i32) {
    %c0_i32 = arith.constant 0 : i32
    %c0_i32_0 = arith.constant 0 : i32
    %c0_i32_1 = arith.constant 0 : i32
    return %c0_i32, %c0_i32_0 : i32, i32
  }
  func.func @transform_6(%arg0: i32) -> (i32, i32) {
    %c0_i32 = arith.constant 0 : i32
    %c0_i32_0 = arith.constant 0 : i32
    %c0_i32_1 = arith.constant 0 : i32
    return %c0_i32, %c0_i32_0 : i32, i32
  }
  func.func @transform_7(%arg0: i32) -> (i32, i32) {
    %c0_i32 = arith.constant 0 : i32
    %c0_i32_0 = arith.constant 0 : i32
    %c0_i32_1 = arith.constant 0 : i32
    return %c0_i32, %c0_i32_0 : i32, i32
  }
  func.func @transform_8(%arg0: i32) -> (i32, i32) {
    %c0_i32 = arith.constant 0 : i32
    %c0_i32_0 = arith.constant 0 : i32
    %c0_i32_1 = arith.constant 0 : i32
    return %c0_i32, %c0_i32_0 : i32, i32
  }
  func.func @transform_9(%arg0: i32) -> (i32, i32) {
    %c0_i32 = arith.constant 0 : i32
    %c0_i32_0 = arith.constant 0 : i32
    %c0_i32_1 = arith.constant 0 : i32
    return %c0_i32, %c0_i32_0 : i32, i32
  }
  func.func @transform_10(%arg0: i32) -> (i32, i32) {
    %c0_i32 = arith.constant 0 : i32
    %c0_i32_0 = arith.constant 0 : i32
    %c0_i32_1 = arith.constant 0 : i32
    return %c0_i32, %c0_i32_0 : i32, i32
  }
  func.func @transform_11(%arg0: i32) -> (i32, i32) {
    %c0_i32 = arith.constant 0 : i32
    %c0_i32_0 = arith.constant 0 : i32
    %c0_i32_1 = arith.constant 0 : i32
    return %c0_i32, %c0_i32_0 : i32, i32
  }
}

</mosaic_0001>

<llo_original>
// kernel: tpu_custom_call.1
$region0: #{tpu_custom_call.1}
  #allocation0 [shape = 'u32[]', space=smem, size = 0x4, offset = 0x4, fixed_abs, tag = 'smem constant byte address 0x4 - core index']
  #allocation1 [shape = 'u32[144,128]{1,0:T(1,128)}', space=vmem, size = 0x12000, scoped, tag = 'internal scratch']
  %s0 = inlined_call_operand.vmem [shape: f32[32,64], index: 0, kind: input, shape index: {}]
  %s1 = inlined_call_operand.vmem [shape: f32[192,112], index: 1, kind: input, shape index: {}]
  %s2 = inlined_call_operand.vmem [shape: f32[1,112], index: 2, kind: input, shape index: {}]
  %s3 = inlined_call_operand.vmem [shape: f32[1,8], index: 3, kind: input, shape index: {}]
  %s4 = inlined_call_operand.vmem [shape: f32[1,8], index: 4, kind: input, shape index: {}]
  %s5 = inlined_call_operand.vmem [shape: f32[168,64], index: 5, kind: input, shape index: {}]
  %s6 = inlined_call_operand.vmem [shape: f32[1,64], index: 6, kind: input, shape index: {}]
  %s7 = inlined_call_operand.vmem [shape: f32[64,32], index: 7, kind: input, shape index: {}]
  %s8 = inlined_call_operand.vmem [shape: f32[1,32], index: 8, kind: input, shape index: {}]
  %s9 = inlined_call_operand.vmem [shape: f32[32,24], index: 9, kind: input, shape index: {}]
  %s10 = inlined_call_operand.vmem [shape: f32[1,24], index: 10, kind: input, shape index: {}]
  %s11 = inlined_call_operand.hbm [shape: f32[2,24], index: 11, kind: output, shape index: {}]
  %s12 = sld [smem:[#allocation0]]
  $region54: #{tpu_custom_call.1} parent=0
    _
  %s14 = ssub.s32 1, %s12
  %s15 = scalar_select 0, %s14, %s12
  $region1: #{tpu_custom_call.1} parent=0
    #allocation2 [shape = 'u8[1024]{0}', space=vmem, size = 0x400, scoped, tag = 'output window, operand 0, single buffered']
    #allocation3 [shape = 's32[1]{0}', space=sflag, size = 0x4, scoped, tag = 'scoped memory for tpu_custom_call.1']
    %16 = vsyncpa [#allocation3], 0
    // Predicated region
    $region2: #{tpu_custom_call.1} parent=1 // pred_check
      _
    $region3: #{tpu_custom_call.1} parent=1 // pred_check_branch
      %18 = sbr.rel (0) target = $region5
    $region4: #{tpu_custom_call.1} parent=1 // pred_region
      _
    $region5: #{tpu_custom_call.1} parent=1 // pred_fallthru
      _
    // Predicated region
    $region6: #{tpu_custom_call.1} parent=1 // pred_check
      _
    $region7: #{tpu_custom_call.1} parent=1 // pred_check_branch
      %20 = sbr.rel (0) target = $region9
    $region8: #{tpu_custom_call.1} parent=1 // pred_region
      _
    $region9: #{tpu_custom_call.1} parent=1 // pred_fallthru
      _
    // Predicated region
    $region10: #{tpu_custom_call.1} parent=1 // pred_check
      _
    $region11: #{tpu_custom_call.1} parent=1 // pred_check_branch
      %22 = sbr.rel (0) target = $region13
    $region12: #{tpu_custom_call.1} parent=1 // pred_region
      _
    $region13: #{tpu_custom_call.1} parent=1 // pred_fallthru
      _
    // Predicated region
    $region14: #{tpu_custom_call.1} parent=1 // pred_check
      _
    $region15: #{tpu_custom_call.1} parent=1 // pred_check_branch
      %24 = sbr.rel (0) target = $region17
    $region16: #{tpu_custom_call.1} parent=1 // pred_region
      _
    $region17: #{tpu_custom_call.1} parent=1 // pred_fallthru
      _
    // Predicated region
    $region18: #{tpu_custom_call.1} parent=1 // pred_check
      _
    $region19: #{tpu_custom_call.1} parent=1 // pred_check_branch
      %26 = sbr.rel (0) target = $region21
    $region20: #{tpu_custom_call.1} parent=1 // pred_region
      _
    $region21: #{tpu_custom_call.1} parent=1 // pred_fallthru
      _
    // Predicated region
    $region22: #{tpu_custom_call.1} parent=1 // pred_check
      _
    $region23: #{tpu_custom_call.1} parent=1 // pred_check_branch
      %28 = sbr.rel (0) target = $region25
    $region24: #{tpu_custom_call.1} parent=1 // pred_region
      _
    $region25: #{tpu_custom_call.1} parent=1 // pred_fallthru
      _
    // Predicated region
    $region26: #{tpu_custom_call.1} parent=1 // pred_check
      _
    $region27: #{tpu_custom_call.1} parent=1 // pred_check_branch
      %30 = sbr.rel (0) target = $region29
    $region28: #{tpu_custom_call.1} parent=1 // pred_region
      _
    $region29: #{tpu_custom_call.1} parent=1 // pred_fallthru
      _
    // Predicated region
    $region30: #{tpu_custom_call.1} parent=1 // pred_check
      _
    $region31: #{tpu_custom_call.1} parent=1 // pred_check_branch
      %32 = sbr.rel (0) target = $region33
    $region32: #{tpu_custom_call.1} parent=1 // pred_region
      _
    $region33: #{tpu_custom_call.1} parent=1 // pred_fallthru
      _
    // Predicated region
    $region34: #{tpu_custom_call.1} parent=1 // pred_check
      _
    $region35: #{tpu_custom_call.1} parent=1 // pred_check_branch
      %34 = sbr.rel (0) target = $region37
    $region36: #{tpu_custom_call.1} parent=1 // pred_region
      _
    $region37: #{tpu_custom_call.1} parent=1 // pred_fallthru
      _
    // Predicated region
    $region38: #{tpu_custom_call.1} parent=1 // pred_check
      _
    $region39: #{tpu_custom_call.1} parent=1 // pred_check_branch
      %36 = sbr.rel (0) target = $region41
    $region40: #{tpu_custom_call.1} parent=1 // pred_region
      _
    $region41: #{tpu_custom_call.1} parent=1 // pred_fallthru
      _
    // Predicated region
    $region42: #{tpu_custom_call.1} parent=1 // pred_check
      _
    $region43: #{tpu_custom_call.1} parent=1 // pred_check_branch
      %38 = sbr.rel (0) target = $region45
    $region44: #{tpu_custom_call.1} parent=1 // pred_region
      _
    $region45: #{tpu_custom_call.1} parent=1 // pred_fallthru
      _
    %v39 = vld [vmem:[%s1] sm:$0xff]
    %v40 = vld [vmem:[%s1 + $0x8] sm:$0xff]
    %v41 = vld [vmem:[%s1 + $0x10] sm:$0xff]
    %v42 = vld [vmem:[%s1 + $0x18] sm:$0xff]
    %v43 = vld [vmem:[%s1 + $0x20] sm:$0xff]
    %v44 = vld [vmem:[%s1 + $0x28] sm:$0xff]
    %v45 = vld [vmem:[%s1 + $0x30] sm:$0xff]
    %v46 = vld [vmem:[%s1 + $0x38] sm:$0xff]
    %v47 = vld [vmem:[%s1 + $0x40] sm:$0xff]
    %v48 = vld [vmem:[%s1 + $0x48] sm:$0xff]
    %v49 = vld [vmem:[%s1 + $0x50] sm:$0xff]
    %v50 = vld [vmem:[%s1 + $0x58] sm:$0xff]
    %v51 = vld [vmem:[%s1 + $0x60] sm:$0xff]
    %v52 = vld [vmem:[%s1 + $0x68] sm:$0xff]
    %v53 = vld [vmem:[%s1 + $0x70] sm:$0xff]
    %v54 = vld [vmem:[%s1 + $0x78] sm:$0xff]
    %v55 = vld [vmem:[%s1 + $0x80] sm:$0xff]
    %v56 = vld [vmem:[%s1 + $0x88] sm:$0xff]
    %v57 = vld [vmem:[%s1 + $0x90] sm:$0xff]
    %v58 = vld [vmem:[%s1 + $0x98] sm:$0xff]
    %v59 = vld [vmem:[%s1 + $0xa0] sm:$0xff]
    %v60 = vld [vmem:[%s1 + $0xa8] sm:$0xff]
    %v61 = vld [vmem:[%s1 + $0xb0] sm:$0xff]
    %v62 = vld [vmem:[%s1 + $0xb8] sm:$0xff]
    %v63 = vld [vmem:[%s2] sm:$0x1]
    %v64 = vld [vmem:[%s5] sm:$0xff]
    %v65 = vld [vmem:[%s5 + $0x8] sm:$0xff]
    %v66 = vld [vmem:[%s5 + $0x10] sm:$0xff]
    %v67 = vld [vmem:[%s5 + $0x18] sm:$0xff]
    %v68 = vld [vmem:[%s5 + $0x20] sm:$0xff]
    %v69 = vld [vmem:[%s5 + $0x28] sm:$0xff]
    %v70 = vld [vmem:[%s5 + $0x30] sm:$0xff]
    %v71 = vld [vmem:[%s5 + $0x38] sm:$0xff]
    %v72 = vld [vmem:[%s5 + $0x40] sm:$0xff]
    %v73 = vld [vmem:[%s5 + $0x48] sm:$0xff]
    %v74 = vld [vmem:[%s5 + $0x50] sm:$0xff]
    %v75 = vld [vmem:[%s5 + $0x58] sm:$0xff]
    %v76 = vld [vmem:[%s5 + $0x60] sm:$0xff]
    %v77 = vld [vmem:[%s5 + $0x68] sm:$0xff]
    %v78 = vld [vmem:[%s5 + $0x70] sm:$0xff]
    %v79 = vld [vmem:[%s5 + $0x78] sm:$0xff]
    %v80 = vld [vmem:[%s5 + $0x80] sm:$0xff]
    %v81 = vld [vmem:[%s5 + $0x88] sm:$0xff]
    %v82 = vld [vmem:[%s5 + $0x90] sm:$0xff]
    %v83 = vld [vmem:[%s5 + $0x98] sm:$0xff]
    %v84 = vld [vmem:[%s5 + $0xa0] sm:$0xff]
    %v85 = vld [vmem:[%s6] sm:$0x1]
    %v86 = vld [vmem:[%s3] sm:$0x1]
    %v87 = vld [vmem:[%s4] sm:$0x1]
    %v88 = vld [vmem:[%s0] sm:$0xff]
    %v89 = vld [vmem:[%s0 + $0x8] sm:$0x3f]
    %v90 = vld [vmem:[%s0 + $0x1] sm:$0xff]
    %v91 = vld [vmem:[%s0 + $0x9] sm:$0x3f]
    %v92 = vld [vmem:[%s0 + $0x2] sm:$0xff]
    %v93 = vld [vmem:[%s0 + $0xa] sm:$0x3f]
    %96 = vrot.lane.b32.xlu0 %v90, 64
    %v97 = vpop.permute.xlu0 %96
    %98 = vrot.lane.b32.xlu0 %v91, 64
    %v99 = vpop.permute.xlu0 %98
    %vm102 = vcmask 523264
    %v103 = vsel %vm102, %v88, %v97
    %v104 = vsel %vm102, %v89, %v99
    %v106 = vlaneseq
    %v107 = vshrl.u32 %v106, 7
    %v108 = vsub.s32 0, %v107
    %v109 = vrot.slane %v63, %v108
    %v112 = vsel %vm102, %v92, 0
    %v115 = vsel %vm102, %v93, 0
    %117 = vmatprep.subr.mxu0 0.0
    %118 = vmatpush1.msra.mxu0 %v54
    %119 = vmatprep.subr.mxu0 0.0
    %120 = vmatpush1.msra.mxu0 %v53
    %121 = vmatprep.subr.mxu0 0.0
    %122 = vmatpush1.msra.mxu0 %v52
    %123 = vmatprep.subr.mxu0 0.0
    %124 = vmatpush1.msra.mxu0 %v51
    %125 = vmatprep.subr.mxu0 0.0
    %126 = vmatpush1.msra.mxu0 %v50
    %127 = vmatprep.subr.mxu0 0.0
    %128 = vmatpush1.msra.mxu0 %v49
    %129 = vmatprep.subr.mxu0 0.0
    %130 = vmatpush1.msra.mxu0 %v48
    %131 = vmatprep.subr.mxu0 0.0
    %132 = vmatpush1.msra.mxu0 %v47
    %133 = vmatprep.subr.mxu0 0.0
    %134 = vmatpush1.msra.mxu0 %v46
    %135 = vmatprep.subr.mxu0 0.0
    %136 = vmatpush1.msra.mxu0 %v45
    %137 = vmatprep.subr.mxu0 0.0
    %138 = vmatpush1.msra.mxu0 %v44
    %139 = vmatprep.subr.mxu0 0.0
    %140 = vmatpush1.msra.mxu0 %v43
    %141 = vmatprep.subr.mxu0 0.0
    %142 = vmatpush1.msra.mxu0 %v42
    %143 = vmatprep.subr.mxu0 0.0
    %144 = vmatpush1.msra.mxu0 %v41
    %145 = vmatprep.subr.mxu0 0.0
    %146 = vmatpush1.msra.mxu0 %v40
    %147 = vmatprep.subr.mxu0 0.0
    %148 = vmatpush1.msra.mxu0 %v39
    %149 = vmatprep.subr.mxu0 0.0
    %150 = vmatpush2.msra.mxu0 0.0
    %151 = vmatprep.subr.mxu0 0.0
    %152 = vmatpush2.msra.mxu0 0.0
    %153 = vmatprep.subr.mxu0 0.0
    %154 = vmatpush2.msra.mxu0 0.0
    %155 = vmatprep.subr.mxu0 0.0
    %156 = vmatpush2.msra.mxu0 0.0
    %157 = vmatprep.subr.mxu0 0.0
    %158 = vmatpush2.msra.mxu0 0.0
    %159 = vmatprep.subr.mxu0 0.0
    %160 = vmatpush2.msra.mxu0 0.0
    %161 = vmatprep.subr.mxu0 0.0
    %162 = vmatpush2.msra.mxu0 0.0
    %163 = vmatprep.subr.mxu0 0.0
    %164 = vmatpush2.msra.mxu0 0.0
    %165 = vmatprep.subr.mxu0 0.0
    %166 = vmatpush2.msra.mxu0 %v62
    %167 = vmatprep.subr.mxu0 0.0
    %168 = vmatpush2.msra.mxu0 %v61
    %169 = vmatprep.subr.mxu0 0.0
    %170 = vmatpush2.msra.mxu0 %v60
    %171 = vmatprep.subr.mxu0 0.0
    %172 = vmatpush2.msra.mxu0 %v59
    %173 = vmatprep.subr.mxu0 0.0
    %174 = vmatpush2.msra.mxu0 %v58
    %175 = vmatprep.subr.mxu0 0.0
    %176 = vmatpush2.msra.mxu0 %v57
    %177 = vmatprep.subr.mxu0 0.0
    %178 = vmatpush2.msra.mxu0 %v56
    %179 = vmatprep.subr.mxu0 0.0
    %180 = vmatpush2.msra.mxu0 %v55
    %181 = vmatprep.mubr.f32.mxu0 %v112
    %182 = vmatmul.mubr.f32.gmra.mxu0 %v103
    %v183 = vpop.f32.mrf.mxu0
    %v184 = vadd.f32 %v109, %v183
    %v185 = vpop.f32.mrf.mxu0
    %186 = vmatprep.mubr.f32.mxu0 %v115
    %187 = vmatmul.mubr.f32.gmra.mxu0 %v104
    %v188 = vpop.f32.mrf.mxu0
    %v189 = vadd.f32 %v109, %v188
    %v190 = vpop.f32.mrf.mxu0
    %191 = vdwg.mxu0
    %v192 = vmax.f32 %v184, 0.0
    %v193 = vmax.f32 %v189, 0.0
    %v194 = vld [vmem:[%s0 + $0x10] sm:$0xff]
    %v195 = vld [vmem:[%s0 + $0x18] sm:$0x3f]
    %v196 = vld [vmem:[%s0 + $0x11] sm:$0xff]
    %v197 = vld [vmem:[%s0 + $0x19] sm:$0x3f]
    %v198 = vld [vmem:[%s0 + $0x12] sm:$0xff]
    %v199 = vld [vmem:[%s0 + $0x1a] sm:$0x3f]
    %202 = vrot.lane.b32.xlu0 %v196, 64
    %v203 = vpop.permute.xlu0 %202
    %204 = vrot.lane.b32.xlu0 %v197, 64
    %v205 = vpop.permute.xlu0 %204
    %v208 = vsel %vm102, %v194, %v203
    %v209 = vsel %vm102, %v195, %v205
    %v211 = vsel %vm102, %v198, 0
    %v214 = vsel %vm102, %v199, 0
    %216 = vmatprep.subr.mxu0 0.0
    %217 = vmatpush1.msra.mxu0 %v54
    %218 = vmatprep.subr.mxu0 0.0
    %219 = vmatpush1.msra.mxu0 %v53
    %220 = vmatprep.subr.mxu0 0.0
    %221 = vmatpush1.msra.mxu0 %v52
    %222 = vmatprep.subr.mxu0 0.0
    %223 = vmatpush1.msra.mxu0 %v51
    %224 = vmatprep.subr.mxu0 0.0
    %225 = vmatpush1.msra.mxu0 %v50
    %226 = vmatprep.subr.mxu0 0.0
    %227 = vmatpush1.msra.mxu0 %v49
    %228 = vmatprep.subr.mxu0 0.0
    %229 = vmatpush1.msra.mxu0 %v48
    %230 = vmatprep.subr.mxu0 0.0
    %231 = vmatpush1.msra.mxu0 %v47
    %232 = vmatprep.subr.mxu0 0.0
    %233 = vmatpush1.msra.mxu0 %v46
    %234 = vmatprep.subr.mxu0 0.0
    %235 = vmatpush1.msra.mxu0 %v45
    %236 = vmatprep.subr.mxu0 0.0
    %237 = vmatpush1.msra.mxu0 %v44
    %238 = vmatprep.subr.mxu0 0.0
    %239 = vmatpush1.msra.mxu0 %v43
    %240 = vmatprep.subr.mxu0 0.0
    %241 = vmatpush1.msra.mxu0 %v42
    %242 = vmatprep.subr.mxu0 0.0
    %243 = vmatpush1.msra.mxu0 %v41
    %244 = vmatprep.subr.mxu0 0.0
    %245 = vmatpush1.msra.mxu0 %v40
    %246 = vmatprep.subr.mxu0 0.0
    %247 = vmatpush1.msra.mxu0 %v39
    %248 = vmatprep.subr.mxu0 0.0
    %249 = vmatpush2.msra.mxu0 0.0
    %250 = vmatprep.subr.mxu0 0.0
    %251 = vmatpush2.msra.mxu0 0.0
    %252 = vmatprep.subr.mxu0 0.0
    %253 = vmatpush2.msra.mxu0 0.0
    %254 = vmatprep.subr.mxu0 0.0
    %255 = vmatpush2.msra.mxu0 0.0
    %256 = vmatprep.subr.mxu0 0.0
    %257 = vmatpush2.msra.mxu0 0.0
    %258 = vmatprep.subr.mxu0 0.0
    %259 = vmatpush2.msra.mxu0 0.0
    %260 = vmatprep.subr.mxu0 0.0
    %261 = vmatpush2.msra.mxu0 0.0
    %262 = vmatprep.subr.mxu0 0.0
    %263 = vmatpush2.msra.mxu0 0.0
    %264 = vmatprep.subr.mxu0 0.0
    %265 = vmatpush2.msra.mxu0 %v62
    %266 = vmatprep.subr.mxu0 0.0
    %267 = vmatpush2.msra.mxu0 %v61
    %268 = vmatprep.subr.mxu0 0.0
    %269 = vmatpush2.msra.mxu0 %v60
    %270 = vmatprep.subr.mxu0 0.0
    %271 = vmatpush2.msra.mxu0 %v59
    %272 = vmatprep.subr.mxu0 0.0
    %273 = vmatpush2.msra.mxu0 %v58
    %274 = vmatprep.subr.mxu0 0.0
    %275 = vmatpush2.msra.mxu0 %v57
    %276 = vmatprep.subr.mxu0 0.0
    %277 = vmatpush2.msra.mxu0 %v56
    %278 = vmatprep.subr.mxu0 0.0
    %279 = vmatpush2.msra.mxu0 %v55
    %280 = vmatprep.mubr.f32.mxu0 %v211
    %281 = vmatmul.mubr.f32.gmra.mxu0 %v208
    %v282 = vpop.f32.mrf.mxu0
    %v283 = vadd.f32 %v109, %v282
    %v284 = vpop.f32.mrf.mxu0
    %285 = vmatprep.mubr.f32.mxu0 %v214
    %286 = vmatmul.mubr.f32.gmra.mxu0 %v209
    %v287 = vpop.f32.mrf.mxu0
    %v288 = vadd.f32 %v109, %v287
    %v289 = vpop.f32.mrf.mxu0
    %290 = vdwg.mxu0
    %v291 = vmax.f32 %v283, 0.0
    %v292 = vmax.f32 %v288, 0.0
    %vm293 = vcmask 916480
    %v294 = vsel %vm293, %v192, 0.0
    %vm295 = vcmask 914432
    %v296 = vsel %vm295, %v193, 0.0
    %v297 = vadd.f32 %v294, %v296
    %v298 = vrot.slane %v297, 4
    %v299 = vadd.f32 %v297, %v298
    %v300 = vrot.slane %v299, 2
    %v301 = vadd.f32 %v299, %v300
    %v302 = vrot.slane %v301, 1
    %v303 = vadd.f32 %v301, %v302
    %v304 = vsel %vm293, %v291, 0.0
    %v305 = vsel %vm295, %v292, 0.0
    %v306 = vadd.f32 %v304, %v305
    %v307 = vrot.slane %v306, 4
    %v308 = vadd.f32 %v306, %v307
    %v309 = vrot.slane %v308, 2
    %v310 = vadd.f32 %v308, %v309
    %v311 = vrot.slane %v310, 1
    %v312 = vadd.f32 %v310, %v311
    %v313 = vadd.f32 %v303, %v312
    %315 = vrot.lane.b32.xlu0 %v313, 120
    %v316 = vpop.permute.xlu0 %315
    %v318 = vadd.f32 %v313, %v316
    %319 = vrot.lane.b32.xlu0 %v313, 112
    %v320 = vpop.permute.xlu0 %319
    %v322 = vadd.f32 %v318, %v320
    %323 = vrot.lane.b32.xlu0 %v313, 104
    %v324 = vpop.permute.xlu0 %323
    %v326 = vadd.f32 %v322, %v324
    %327 = vrot.lane.b32.xlu0 %v313, 96
    %v328 = vpop.permute.xlu0 %327
    %v330 = vadd.f32 %v326, %v328
    %331 = vrot.lane.b32.xlu0 %v313, 88
    %v332 = vpop.permute.xlu0 %331
    %v334 = vadd.f32 %v330, %v332
    %335 = vrot.lane.b32.xlu0 %v313, 80
    %v336 = vpop.permute.xlu0 %335
    %v338 = vadd.f32 %v334, %v336
    %339 = vrot.lane.b32.xlu0 %v313, 72
    %v340 = vpop.permute.xlu0 %339
    %v342 = vadd.f32 %v338, %v340
    %343 = vrot.lane.b32.xlu0 %v313, 64
    %v344 = vpop.permute.xlu0 %343
    %v346 = vadd.f32 %v342, %v344
    %347 = vrot.lane.b32.xlu0 %v313, 56
    %v348 = vpop.permute.xlu0 %347
    %v350 = vadd.f32 %v346, %v348
    %351 = vrot.lane.b32.xlu0 %v313, 48
    %v352 = vpop.permute.xlu0 %351
    %v354 = vadd.f32 %v350, %v352
    %355 = vrot.lane.b32.xlu0 %v313, 40
    %v356 = vpop.permute.xlu0 %355
    %v358 = vadd.f32 %v354, %v356
    %359 = vrot.lane.b32.xlu0 %v313, 32
    %v360 = vpop.permute.xlu0 %359
    %v362 = vadd.f32 %v358, %v360
    %363 = vrot.lane.b32.xlu0 %v313, 24
    %v364 = vpop.permute.xlu0 %363
    %v366 = vadd.f32 %v362, %v364
    %v367 = vrcp.pop 392.0
    %v368 = vmul.f32 %v366, %v367
    %370 = vrot.lane.b32.xlu0 %v368, 8
    %v371 = vpop.permute.xlu0 %370
    %373 = vrot.lane.b32.xlu0 %v368, 16
    %v374 = vpop.permute.xlu0 %373
    %376 = vrot.lane.b32.xlu0 %v368, 24
    %v377 = vpop.permute.xlu0 %376
    %379 = vrot.lane.b32.xlu0 %v368, 32
    %v380 = vpop.permute.xlu0 %379
    %382 = vrot.lane.b32.xlu0 %v368, 40
    %v383 = vpop.permute.xlu0 %382
    %385 = vrot.lane.b32.xlu0 %v368, 48
    %v386 = vpop.permute.xlu0 %385
    %388 = vrot.lane.b32.xlu0 %v368, 56
    %v389 = vpop.permute.xlu0 %388
    %391 = vrot.lane.b32.xlu0 %v368, 64
    %v392 = vpop.permute.xlu0 %391
    %394 = vrot.lane.b32.xlu0 %v368, 72
    %v395 = vpop.permute.xlu0 %394
    %397 = vrot.lane.b32.xlu0 %v368, 80
    %v398 = vpop.permute.xlu0 %397
    %400 = vrot.lane.b32.xlu0 %v368, 88
    %v401 = vpop.permute.xlu0 %400
    %403 = vrot.lane.b32.xlu0 %v368, 96
    %v404 = vpop.permute.xlu0 %403
    %406 = vrot.lane.b32.xlu0 %v368, 104
    %v407 = vpop.permute.xlu0 %406
    %vm409 = vcmask 64512
    %v410 = vsel %vm409, %v368, %v371
    %vm411 = vcmask 130048
    %v412 = vsel %vm411, %v410, %v374
    %vm413 = vcmask 195584
    %v414 = vsel %vm413, %v412, %v377
    %vm415 = vcmask 261120
    %v416 = vsel %vm415, %v414, %v380
    %vm417 = vcmask 326656
    %v418 = vsel %vm417, %v416, %v383
    %vm419 = vcmask 392192
    %v420 = vsel %vm419, %v418, %v386
    %vm421 = vcmask 457728
    %v422 = vsel %vm421, %v420, %v389
    %v423 = vsel %vm102, %v422, %v392
    %vm424 = vcmask 588800
    %v425 = vsel %vm424, %v423, %v395
    %vm426 = vcmask 654336
    %v427 = vsel %vm426, %v425, %v398
    %vm428 = vcmask 719872
    %v429 = vsel %vm428, %v427, %v401
    %vm430 = vcmask 785408
    %v431 = vsel %vm430, %v429, %v404
    %vm432 = vcmask 850944
    %v433 = vsel %vm432, %v431, %v407
    %v434 = vlaneseq
    %v435 = vshrl.u32 %v434, 7
    %v436 = vsub.s32 0, %v435
    %v437 = vrot.slane %v433, %v436
    %v438 = vsub.f32 %v192, %v437
    %v439 = vsub.f32 %v193, %v437
    %v440 = vmul.f32 %v438, %v438
    %v441 = vmul.f32 %v439, %v439
    %v442 = vsel %vm293, %v440, 0.0
    %v443 = vsel %vm295, %v441, 0.0
    %v444 = vadd.f32 %v442, %v443
    %v445 = vrot.slane %v444, 4
    %v446 = vadd.f32 %v444, %v445
    %v447 = vrot.slane %v446, 2
    %v448 = vadd.f32 %v446, %v447
    %v449 = vrot.slane %v448, 1
    %v450 = vadd.f32 %v448, %v449
    %v451 = vsub.f32 %v291, %v437
    %v452 = vsub.f32 %v292, %v437
    %v453 = vmul.f32 %v451, %v451
    %v454 = vmul.f32 %v452, %v452
    %v455 = vsel %vm293, %v453, 0.0
    %v456 = vsel %vm295, %v454, 0.0
    %v457 = vadd.f32 %v455, %v456
    %v458 = vrot.slane %v457, 4
    %v459 = vadd.f32 %v457, %v458
    %v460 = vrot.slane %v459, 2
    %v461 = vadd.f32 %v459, %v460
    %v462 = vrot.slane %v461, 1
    %v463 = vadd.f32 %v461, %v462
    %v464 = vadd.f32 %v450, %v463
    %466 = vrot.lane.b32.xlu0 %v464, 120
    %v467 = vpop.permute.xlu0 %466
    %v469 = vadd.f32 %v464, %v467
    %470 = vrot.lane.b32.xlu0 %v464, 112
    %v471 = vpop.permute.xlu0 %470
    %v473 = vadd.f32 %v469, %v471
    %474 = vrot.lane.b32.xlu0 %v464, 104
    %v475 = vpop.permute.xlu0 %474
    %v477 = vadd.f32 %v473, %v475
    %478 = vrot.lane.b32.xlu0 %v464, 96
    %v479 = vpop.permute.xlu0 %478
    %v481 = vadd.f32 %v477, %v479
    %482 = vrot.lane.b32.xlu0 %v464, 88
    %v483 = vpop.permute.xlu0 %482
    %v485 = vadd.f32 %v481, %v483
    %486 = vrot.lane.b32.xlu0 %v464, 80
    %v487 = vpop.permute.xlu0 %486
    %v489 = vadd.f32 %v485, %v487
    %490 = vrot.lane.b32.xlu0 %v464, 72
    %v491 = vpop.permute.xlu0 %490
    %v493 = vadd.f32 %v489, %v491
    %494 = vrot.lane.b32.xlu0 %v464, 64
    %v495 = vpop.permute.xlu0 %494
    %v497 = vadd.f32 %v493, %v495
    %498 = vrot.lane.b32.xlu0 %v464, 56
    %v499 = vpop.permute.xlu0 %498
    %v501 = vadd.f32 %v497, %v499
    %502 = vrot.lane.b32.xlu0 %v464, 48
    %v503 = vpop.permute.xlu0 %502
    %v505 = vadd.f32 %v501, %v503
    %506 = vrot.lane.b32.xlu0 %v464, 40
    %v507 = vpop.permute.xlu0 %506
    %v509 = vadd.f32 %v505, %v507
    %510 = vrot.lane.b32.xlu0 %v464, 32
    %v511 = vpop.permute.xlu0 %510
    %v513 = vadd.f32 %v509, %v511
    %514 = vrot.lane.b32.xlu0 %v464, 24
    %v515 = vpop.permute.xlu0 %514
    %v517 = vadd.f32 %v513, %v515
    %v518 = vmul.f32 %v517, %v367
    %v519 = vadd.f32 %v518, 1e-05
    %v520 = vrsqrt.pop %v519
    %v521 = vmul.f32 %v520, %v86
    %v522 = vmul.f32 %v368, %v521
    %v523 = vsub.f32 %v87, %v522
    %525 = vrot.lane.b32.xlu0 %v521, 8
    %v526 = vpop.permute.xlu0 %525
    %528 = vrot.lane.b32.xlu0 %v521, 16
    %v529 = vpop.permute.xlu0 %528
    %531 = vrot.lane.b32.xlu0 %v521, 24
    %v532 = vpop.permute.xlu0 %531
    %534 = vrot.lane.b32.xlu0 %v521, 32
    %v535 = vpop.permute.xlu0 %534
    %537 = vrot.lane.b32.xlu0 %v521, 40
    %v538 = vpop.permute.xlu0 %537
    %540 = vrot.lane.b32.xlu0 %v521, 48
    %v541 = vpop.permute.xlu0 %540
    %543 = vrot.lane.b32.xlu0 %v521, 56
    %v544 = vpop.permute.xlu0 %543
    %546 = vrot.lane.b32.xlu0 %v521, 64
    %v547 = vpop.permute.xlu0 %546
    %549 = vrot.lane.b32.xlu0 %v521, 72
    %v550 = vpop.permute.xlu0 %549
    %552 = vrot.lane.b32.xlu0 %v521, 80
    %v553 = vpop.permute.xlu0 %552
    %555 = vrot.lane.b32.xlu0 %v521, 88
    %v556 = vpop.permute.xlu0 %555
    %558 = vrot.lane.b32.xlu0 %v521, 96
    %v559 = vpop.permute.xlu0 %558
    %561 = vrot.lane.b32.xlu0 %v521, 104
    %v562 = vpop.permute.xlu0 %561
    %v564 = vsel %vm409, %v521, %v526
    %v565 = vsel %vm411, %v564, %v529
    %v566 = vsel %vm413, %v565, %v532
    %v567 = vsel %vm415, %v566, %v535
    %v568 = vsel %vm417, %v567, %v538
    %v569 = vsel %vm419, %v568, %v541
    %v570 = vsel %vm421, %v569, %v544
    %v571 = vsel %vm102, %v570, %v547
    %v572 = vsel %vm424, %v571, %v550
    %v573 = vsel %vm426, %v572, %v553
    %v574 = vsel %vm428, %v573, %v556
    %v575 = vsel %vm430, %v574, %v559
    %v576 = vsel %vm432, %v575, %v562
    %v578 = vlaneseq
    %v579 = vshrl.u32 %v578, 7
    %v580 = vsub.s32 0, %v579
    %v581 = vrot.slane %v523, %v580
    %582 = vrot.lane.b32.xlu0 %v581, 8
    %v583 = vpop.permute.xlu0 %582
    %585 = vrot.lane.b32.xlu0 %v581, 16
    %v586 = vpop.permute.xlu0 %585
    %588 = vrot.lane.b32.xlu0 %v581, 24
    %v589 = vpop.permute.xlu0 %588
    %591 = vrot.lane.b32.xlu0 %v581, 32
    %v592 = vpop.permute.xlu0 %591
    %594 = vrot.lane.b32.xlu0 %v581, 40
    %v595 = vpop.permute.xlu0 %594
    %597 = vrot.lane.b32.xlu0 %v581, 48
    %v598 = vpop.permute.xlu0 %597
    %600 = vrot.lane.b32.xlu0 %v581, 56
    %v601 = vpop.permute.xlu0 %600
    %603 = vrot.lane.b32.xlu0 %v581, 64
    %v604 = vpop.permute.xlu0 %603
    %606 = vrot.lane.b32.xlu0 %v581, 72
    %v607 = vpop.permute.xlu0 %606
    %609 = vrot.lane.b32.xlu0 %v581, 80
    %v610 = vpop.permute.xlu0 %609
    %612 = vrot.lane.b32.xlu0 %v581, 88
    %v613 = vpop.permute.xlu0 %612
    %615 = vrot.lane.b32.xlu0 %v581, 96
    %v616 = vpop.permute.xlu0 %615
    %618 = vrot.lane.b32.xlu0 %v581, 104
    %v619 = vpop.permute.xlu0 %618
    %v621 = vsel %vm409, %v523, %v583
    %v622 = vsel %vm411, %v621, %v586
    %v623 = vsel %vm413, %v622, %v589
    %v624 = vsel %vm415, %v623, %v592
    %v625 = vsel %vm417, %v624, %v595
    %v626 = vsel %vm419, %v625, %v598
    %v627 = vsel %vm421, %v626, %v601
    %v628 = vsel %vm102, %v627, %v604
    %v629 = vsel %vm424, %v628, %v607
    %v630 = vsel %vm426, %v629, %v610
    %v631 = vsel %vm428, %v630, %v613
    %v632 = vsel %vm430, %v631, %v616
    %v633 = vsel %vm432, %v632, %v619
    %v634 = vlaneseq
    %v635 = vshrl.u32 %v634, 7
    %v636 = vsub.s32 0, %v635
    %v637 = vrot.slane %v576, %v636
    %v638 = vmul.f32 %v192, %v637
    %v639 = vmul.f32 %v193, %v637
    %v640 = vlaneseq
    %v641 = vshrl.u32 %v640, 7
    %v642 = vsub.s32 0, %v641
    %v643 = vrot.slane %v633, %v642
    %v644 = vadd.f32 %v638, %v643
    %v645 = vadd.f32 %v639, %v643
    %648 = vrot.lane.b32.xlu0 %v644, 72
    %v649 = vpop.permute.xlu0 %648
    %650 = vrot.lane.b32.xlu0 %v645, 72
    %v651 = vpop.permute.xlu0 %650
    %v654 = vmax.f32 %v644, %v649
    %v655 = vmax.f32 %v645, %v651
    %v657 = vrot.slane %v654, 1
    %v659 = vmax.f32 %v654, %v657
    %v661 = vrot.slane %v655, 1
    %v663 = vmax.f32 %v655, %v661
    %v665 = vrot.slane %v659, 1
    %v667 = vrot.slane %v659, 2
    %v669 = vrot.slane %v659, 3
    %v672 = vrot.slane %v663, 4
    %v674 = vrot.slane %v663, 5
    %v676 = vrot.slane %v663, 6
    %vm678 = vcmask 1040384
    %v679 = vsel %vm678, %v659, %v665
    %vm680 = vcmask 1041408
    %v681 = vsel %vm680, %v679, %v667
    %vm682 = vcmask 1042432
    %v683 = vsel %vm682, %v681, %v669
    %vm684 = vcmask 1043456
    %v685 = vsel %vm684, %v683, %v672
    %vm686 = vcmask 1044480
    %v687 = vsel %vm686, %v685, %v674
    %vm688 = vcmask 1045504
    %v689 = vsel %vm688, %v687, %v676
    %v691 = vrot.slane %v689, 1
    %692 = vrot.lane.b32.xlu0 %v691, 56
    %v693 = vpop.permute.xlu0 %692
    %v695 = vrot.slane %v689, 2
    %696 = vrot.lane.b32.xlu0 %v695, 112
    %v697 = vpop.permute.xlu0 %696
    %v699 = vsel %vm421, %v689, %v693
    %v700 = vsel %vm293, %v699, %v697
    %v702 = vlaneseq
    %v703 = vshrl.u32 %v702, 7
    %v704 = vsub.s32 0, %v703
    %v705 = vrot.slane %v85, %v704
    %v707 = vsel %vm417, %v697, 0
    %709 = vmatprep.subr.mxu0 0.0
    %710 = vmatpush1.msra.mxu0 %v79
    %711 = vmatprep.subr.mxu0 0.0
    %712 = vmatpush1.msra.mxu0 %v78
    %713 = vmatprep.subr.mxu0 0.0
    %714 = vmatpush1.msra.mxu0 %v77
    %715 = vmatprep.subr.mxu0 0.0
    %716 = vmatpush1.msra.mxu0 %v76
    %717 = vmatprep.subr.mxu0 0.0
    %718 = vmatpush1.msra.mxu0 %v75
    %719 = vmatprep.subr.mxu0 0.0
    %720 = vmatpush1.msra.mxu0 %v74
    %721 = vmatprep.subr.mxu0 0.0
    %722 = vmatpush1.msra.mxu0 %v73
    %723 = vmatprep.subr.mxu0 0.0
    %724 = vmatpush1.msra.mxu0 %v72
    %725 = vmatprep.subr.mxu0 0.0
    %726 = vmatpush1.msra.mxu0 %v71
    %727 = vmatprep.subr.mxu0 0.0
    %728 = vmatpush1.msra.mxu0 %v70
    %729 = vmatprep.subr.mxu0 0.0
    %730 = vmatpush1.msra.mxu0 %v69
    %731 = vmatprep.subr.mxu0 0.0
    %732 = vmatpush1.msra.mxu0 %v68
    %733 = vmatprep.subr.mxu0 0.0
    %734 = vmatpush1.msra.mxu0 %v67
    %735 = vmatprep.subr.mxu0 0.0
    %736 = vmatpush1.msra.mxu0 %v66
    %737 = vmatprep.subr.mxu0 0.0
    %738 = vmatpush1.msra.mxu0 %v65
    %739 = vmatprep.subr.mxu0 0.0
    %740 = vmatpush1.msra.mxu0 %v64
    %741 = vmatprep.subr.mxu0 0.0
    %742 = vmatpush2.msra.mxu0 0.0
    %743 = vmatprep.subr.mxu0 0.0
    %744 = vmatpush2.msra.mxu0 0.0
    %745 = vmatprep.subr.mxu0 0.0
    %746 = vmatpush2.msra.mxu0 0.0
    %747 = vmatprep.subr.mxu0 0.0
    %748 = vmatpush2.msra.mxu0 0.0
    %749 = vmatprep.subr.mxu0 0.0
    %750 = vmatpush2.msra.mxu0 0.0
    %751 = vmatprep.subr.mxu0 0.0
    %752 = vmatpush2.msra.mxu0 0.0
    %753 = vmatprep.subr.mxu0 0.0
    %754 = vmatpush2.msra.mxu0 0.0
    %755 = vmatprep.subr.mxu0 0.0
    %756 = vmatpush2.msra.mxu0 0.0
    %757 = vmatprep.subr.mxu0 0.0
    %758 = vmatpush2.msra.mxu0 0.0
    %759 = vmatprep.subr.mxu0 0.0
    %760 = vmatpush2.msra.mxu0 0.0
    %761 = vmatprep.subr.mxu0 0.0
    %762 = vmatpush2.msra.mxu0 0.0
    %763 = vmatprep.subr.mxu0 0.0
    %764 = vmatpush2.msra.mxu0 %v84
    %765 = vmatprep.subr.mxu0 0.0
    %766 = vmatpush2.msra.mxu0 %v83
    %767 = vmatprep.subr.mxu0 0.0
    %768 = vmatpush2.msra.mxu0 %v82
    %769 = vmatprep.subr.mxu0 0.0
    %770 = vmatpush2.msra.mxu0 %v81
    %771 = vmatprep.subr.mxu0 0.0
    %772 = vmatpush2.msra.mxu0 %v80
    %773 = vmatprep.mubr.f32.mxu0 %v707
    %774 = vmatmul.mubr.f32.gmra.mxu0 %v700
    %v775 = vpop.f32.mrf.mxu0
    %v776 = vadd.f32 %v705, %v775
    %v777 = vpop.f32.mrf.mxu0
    %778 = vdwg.mxu0
    %v779 = vmax.f32 %v776, 0.0
    %781 = vrot.lane.b32.xlu0 %v779, 96
    %v782 = vpop.permute.xlu0 %781
    %v784 = vmax.f32 %v779, %v782
    %v786 = vrot.slane %v784, 1
    %v788 = vmax.f32 %v784, %v786
    %v790 = vrot.slane %v788, 2
    %791 = vrot.lane.b32.xlu0 %v790, 32
    %v792 = vpop.permute.xlu0 %791
    %v794 = vsel %vm415, %v788, %v792
    %v795 = vmul.f32 %v291, %v637
    %v796 = vmul.f32 %v292, %v637
    %v797 = vadd.f32 %v795, %v643
    %v798 = vadd.f32 %v796, %v643
    %801 = vrot.lane.b32.xlu0 %v797, 72
    %v802 = vpop.permute.xlu0 %801
    %803 = vrot.lane.b32.xlu0 %v798, 72
    %v804 = vpop.permute.xlu0 %803
    %v807 = vmax.f32 %v797, %v802
    %v808 = vmax.f32 %v798, %v804
    %v810 = vrot.slane %v807, 1
    %v812 = vmax.f32 %v807, %v810
    %v814 = vrot.slane %v808, 1
    %v816 = vmax.f32 %v808, %v814
    %v818 = vrot.slane %v812, 1
    %v820 = vrot.slane %v812, 2
    %v822 = vrot.slane %v812, 3
    %v825 = vrot.slane %v816, 4
    %v827 = vrot.slane %v816, 5
    %v829 = vrot.slane %v816, 6
    %v831 = vsel %vm678, %v812, %v818
    %v832 = vsel %vm680, %v831, %v820
    %v833 = vsel %vm682, %v832, %v822
    %v834 = vsel %vm684, %v833, %v825
    %v835 = vsel %vm686, %v834, %v827
    %v836 = vsel %vm688, %v835, %v829
    %v838 = vrot.slane %v836, 1
    %839 = vrot.lane.b32.xlu0 %v838, 56
    %v840 = vpop.permute.xlu0 %839
    %v842 = vrot.slane %v836, 2
    %843 = vrot.lane.b32.xlu0 %v842, 112
    %v844 = vpop.permute.xlu0 %843
    %v846 = vsel %vm421, %v836, %v840
    %v847 = vsel %vm293, %v846, %v844
    %v848 = vsel %vm417, %v844, 0
    %850 = vmatprep.subr.mxu0 0.0
    %851 = vmatpush1.msra.mxu0 %v79
    %852 = vmatprep.subr.mxu0 0.0
    %853 = vmatpush1.msra.mxu0 %v78
    %854 = vmatprep.subr.mxu0 0.0
    %855 = vmatpush1.msra.mxu0 %v77
    %856 = vmatprep.subr.mxu0 0.0
    %857 = vmatpush1.msra.mxu0 %v76
    %858 = vmatprep.subr.mxu0 0.0
    %859 = vmatpush1.msra.mxu0 %v75
    %860 = vmatprep.subr.mxu0 0.0
    %861 = vmatpush1.msra.mxu0 %v74
    %862 = vmatprep.subr.mxu0 0.0
    %863 = vmatpush1.msra.mxu0 %v73
    %864 = vmatprep.subr.mxu0 0.0
    %865 = vmatpush1.msra.mxu0 %v72
    %866 = vmatprep.subr.mxu0 0.0
    %867 = vmatpush1.msra.mxu0 %v71
    %868 = vmatprep.subr.mxu0 0.0
    %869 = vmatpush1.msra.mxu0 %v70
    %870 = vmatprep.subr.mxu0 0.0
    %871 = vmatpush1.msra.mxu0 %v69
    %872 = vmatprep.subr.mxu0 0.0
    %873 = vmatpush1.msra.mxu0 %v68
    %874 = vmatprep.subr.mxu0 0.0
    %875 = vmatpush1.msra.mxu0 %v67
    %876 = vmatprep.subr.mxu0 0.0
    %877 = vmatpush1.msra.mxu0 %v66
    %878 = vmatprep.subr.mxu0 0.0
    %879 = vmatpush1.msra.mxu0 %v65
    %880 = vmatprep.subr.mxu0 0.0
    %881 = vmatpush1.msra.mxu0 %v64
    %882 = vmatprep.subr.mxu0 0.0
    %883 = vmatpush2.msra.mxu0 0.0
    %884 = vmatprep.subr.mxu0 0.0
    %885 = vmatpush2.msra.mxu0 0.0
    %886 = vmatprep.subr.mxu0 0.0
    %887 = vmatpush2.msra.mxu0 0.0
    %888 = vmatprep.subr.mxu0 0.0
    %889 = vmatpush2.msra.mxu0 0.0
    %890 = vmatprep.subr.mxu0 0.0
    %891 = vmatpush2.msra.mxu0 0.0
    %892 = vmatprep.subr.mxu0 0.0
    %893 = vmatpush2.msra.mxu0 0.0
    %894 = vmatprep.subr.mxu0 0.0
    %895 = vmatpush2.msra.mxu0 0.0
    %896 = vmatprep.subr.mxu0 0.0
    %897 = vmatpush2.msra.mxu0 0.0
    %898 = vmatprep.subr.mxu0 0.0
    %899 = vmatpush2.msra.mxu0 0.0
    %900 = vmatprep.subr.mxu0 0.0
    %901 = vmatpush2.msra.mxu0 0.0
    %902 = vmatprep.subr.mxu0 0.0
    %903 = vmatpush2.msra.mxu0 0.0
    %904 = vmatprep.subr.mxu0 0.0
    %905 = vmatpush2.msra.mxu0 %v84
    %906 = vmatprep.subr.mxu0 0.0
    %907 = vmatpush2.msra.mxu0 %v83
    %908 = vmatprep.subr.mxu0 0.0
    %909 = vmatpush2.msra.mxu0 %v82
    %910 = vmatprep.subr.mxu0 0.0
    %911 = vmatpush2.msra.mxu0 %v81
    %912 = vmatprep.subr.mxu0 0.0
    %913 = vmatpush2.msra.mxu0 %v80
    %914 = vmatprep.mubr.f32.mxu0 %v848
    %915 = vmatmul.mubr.f32.gmra.mxu0 %v847
    %v916 = vpop.f32.mrf.mxu0
    %v917 = vadd.f32 %v705, %v916
    %v918 = vpop.f32.mrf.mxu0
    %919 = vdwg.mxu0
    %v920 = vmax.f32 %v917, 0.0
    %922 = vrot.lane.b32.xlu0 %v920, 96
    %v923 = vpop.permute.xlu0 %922
    %v925 = vmax.f32 %v920, %v923
    %v927 = vrot.slane %v925, 1
    %v929 = vmax.f32 %v925, %v927
    %v931 = vrot.slane %v929, 2
    %932 = vrot.lane.b32.xlu0 %v931, 32
    %v933 = vpop.permute.xlu0 %932
    %v935 = vsel %vm415, %v929, %v933
    %v937 = vrot.slane %v935, 7
    %v939 = vsel %vm678, %v794, %v937
    %v940 = vld [vmem:[%s7] sm:$0xff]
    %v941 = vld [vmem:[%s7 + $0x8] sm:$0xff]
    %v942 = vld [vmem:[%s7 + $0x10] sm:$0xff]
    %v943 = vld [vmem:[%s7 + $0x18] sm:$0xff]
    %v944 = vld [vmem:[%s7 + $0x20] sm:$0xff]
    %v945 = vld [vmem:[%s7 + $0x28] sm:$0xff]
    %v946 = vld [vmem:[%s7 + $0x30] sm:$0xff]
    %v947 = vld [vmem:[%s7 + $0x38] sm:$0xff]
    %v948 = vld [vmem:[%s8] sm:$0x1]
    %v950 = vlaneseq
    %v951 = vshrl.u32 %v950, 7
    %v952 = vsub.s32 0, %v951
    %v953 = vrot.slane %v948, %v952
    %v956 = vsel %vm102, %v939, 0
    %958 = vmatprep.subr.mxu0 0.0
    %959 = vmatpush1.msra.mxu0 0.0
    %960 = vmatprep.subr.mxu0 0.0
    %961 = vmatpush1.msra.mxu0 0.0
    %962 = vmatprep.subr.mxu0 0.0
    %963 = vmatpush1.msra.mxu0 0.0
    %964 = vmatprep.subr.mxu0 0.0
    %965 = vmatpush1.msra.mxu0 0.0
    %966 = vmatprep.subr.mxu0 0.0
    %967 = vmatpush1.msra.mxu0 0.0
    %968 = vmatprep.subr.mxu0 0.0
    %969 = vmatpush1.msra.mxu0 0.0
    %970 = vmatprep.subr.mxu0 0.0
    %971 = vmatpush1.msra.mxu0 0.0
    %972 = vmatprep.subr.mxu0 0.0
    %973 = vmatpush1.msra.mxu0 0.0
    %974 = vmatprep.subr.mxu0 0.0
    %975 = vmatpush1.msra.mxu0 %v947
    %976 = vmatprep.subr.mxu0 0.0
    %977 = vmatpush1.msra.mxu0 %v946
    %978 = vmatprep.subr.mxu0 0.0
    %979 = vmatpush1.msra.mxu0 %v945
    %980 = vmatprep.subr.mxu0 0.0
    %981 = vmatpush1.msra.mxu0 %v944
    %982 = vmatprep.subr.mxu0 0.0
    %983 = vmatpush1.msra.mxu0 %v943
    %984 = vmatprep.subr.mxu0 0.0
    %985 = vmatpush1.msra.mxu0 %v942
    %986 = vmatprep.subr.mxu0 0.0
    %987 = vmatpush1.msra.mxu0 %v941
    %988 = vmatprep.subr.mxu0 0.0
    %989 = vmatpush1.msra.mxu0 %v940
    %990 = vmatprep.subr.mxu0 0.0
    %991 = vmatpush2.msra.mxu0 0.0
    %992 = vmatprep.subr.mxu0 0.0
    %993 = vmatpush2.msra.mxu0 0.0
    %994 = vmatprep.subr.mxu0 0.0
    %995 = vmatpush2.msra.mxu0 0.0
    %996 = vmatprep.subr.mxu0 0.0
    %997 = vmatpush2.msra.mxu0 0.0
    %998 = vmatprep.subr.mxu0 0.0
    %999 = vmatpush2.msra.mxu0 0.0
    %1000 = vmatprep.subr.mxu0 0.0
    %1001 = vmatpush2.msra.mxu0 0.0
    %1002 = vmatprep.subr.mxu0 0.0
    %1003 = vmatpush2.msra.mxu0 0.0
    %1004 = vmatprep.subr.mxu0 0.0
    %1005 = vmatpush2.msra.mxu0 0.0
    %1006 = vmatprep.subr.mxu0 0.0
    %1007 = vmatpush2.msra.mxu0 0.0
    %1008 = vmatprep.subr.mxu0 0.0
    %1009 = vmatpush2.msra.mxu0 0.0
    %1010 = vmatprep.subr.mxu0 0.0
    %1011 = vmatpush2.msra.mxu0 0.0
    %1012 = vmatprep.subr.mxu0 0.0
    %1013 = vmatpush2.msra.mxu0 0.0
    %1014 = vmatprep.subr.mxu0 0.0
    %1015 = vmatpush2.msra.mxu0 0.0
    %1016 = vmatprep.subr.mxu0 0.0
    %1017 = vmatpush2.msra.mxu0 0.0
    %1018 = vmatprep.subr.mxu0 0.0
    %1019 = vmatpush2.msra.mxu0 0.0
    %1020 = vmatprep.subr.mxu0 0.0
    %1021 = vmatpush2.msra.mxu0 0.0
    %1022 = vmatprep.mubr.f32.mxu0 0.0
    %1023 = vmatmul.mubr.f32.gmra.mxu0 %v956
    %v1024 = vpop.f32.mrf.mxu0
    %v1025 = vadd.f32 %v953, %v1024
    %v1026 = vpop.f32.mrf.mxu0
    %1027 = vdwg.mxu0
    %v1028 = vmax.f32 %v1025, 0.0
    %v1029 = vld [vmem:[%s9] sm:$0xff]
    %v1030 = vld [vmem:[%s9 + $0x8] sm:$0xff]
    %v1031 = vld [vmem:[%s9 + $0x10] sm:$0xff]
    %v1032 = vld [vmem:[%s9 + $0x18] sm:$0xff]
    %v1033 = vld [vmem:[%s10] sm:$0x1]
    %v1035 = vlaneseq
    %v1036 = vshrl.u32 %v1035, 7
    %v1037 = vsub.s32 0, %v1036
    %v1038 = vrot.slane %v1033, %v1037
    %v1041 = vsel %vm415, %v1028, 0
    %1043 = vmatprep.subr.mxu0 0.0
    %1044 = vmatpush1.msra.mxu0 0.0
    %1045 = vmatprep.subr.mxu0 0.0
    %1046 = vmatpush1.msra.mxu0 0.0
    %1047 = vmatprep.subr.mxu0 0.0
    %1048 = vmatpush1.msra.mxu0 0.0
    %1049 = vmatprep.subr.mxu0 0.0
    %1050 = vmatpush1.msra.mxu0 0.0
    %1051 = vmatprep.subr.mxu0 0.0
    %1052 = vmatpush1.msra.mxu0 0.0
    %1053 = vmatprep.subr.mxu0 0.0
    %1054 = vmatpush1.msra.mxu0 0.0
    %1055 = vmatprep.subr.mxu0 0.0
    %1056 = vmatpush1.msra.mxu0 0.0
    %1057 = vmatprep.subr.mxu0 0.0
    %1058 = vmatpush1.msra.mxu0 0.0
    %1059 = vmatprep.subr.mxu0 0.0
    %1060 = vmatpush1.msra.mxu0 0.0
    %1061 = vmatprep.subr.mxu0 0.0
    %1062 = vmatpush1.msra.mxu0 0.0
    %1063 = vmatprep.subr.mxu0 0.0
    %1064 = vmatpush1.msra.mxu0 0.0
    %1065 = vmatprep.subr.mxu0 0.0
    %1066 = vmatpush1.msra.mxu0 0.0
    %1067 = vmatprep.subr.mxu0 0.0
    %1068 = vmatpush1.msra.mxu0 %v1032
    %1069 = vmatprep.subr.mxu0 0.0
    %1070 = vmatpush1.msra.mxu0 %v1031
    %1071 = vmatprep.subr.mxu0 0.0
    %1072 = vmatpush1.msra.mxu0 %v1030
    %1073 = vmatprep.subr.mxu0 0.0
    %1074 = vmatpush1.msra.mxu0 %v1029
    %1075 = vmatprep.subr.mxu0 0.0
    %1076 = vmatpush2.msra.mxu0 0.0
    %1077 = vmatprep.subr.mxu0 0.0
    %1078 = vmatpush2.msra.mxu0 0.0
    %1079 = vmatprep.subr.mxu0 0.0
    %1080 = vmatpush2.msra.mxu0 0.0
    %1081 = vmatprep.subr.mxu0 0.0
    %1082 = vmatpush2.msra.mxu0 0.0
    %1083 = vmatprep.subr.mxu0 0.0
    %1084 = vmatpush2.msra.mxu0 0.0
    %1085 = vmatprep.subr.mxu0 0.0
    %1086 = vmatpush2.msra.mxu0 0.0
    %1087 = vmatprep.subr.mxu0 0.0
    %1088 = vmatpush2.msra.mxu0 0.0
    %1089 = vmatprep.subr.mxu0 0.0
    %1090 = vmatpush2.msra.mxu0 0.0
    %1091 = vmatprep.subr.mxu0 0.0
    %1092 = vmatpush2.msra.mxu0 0.0
    %1093 = vmatprep.subr.mxu0 0.0
    %1094 = vmatpush2.msra.mxu0 0.0
    %1095 = vmatprep.subr.mxu0 0.0
    %1096 = vmatpush2.msra.mxu0 0.0
    %1097 = vmatprep.subr.mxu0 0.0
    %1098 = vmatpush2.msra.mxu0 0.0
    %1099 = vmatprep.subr.mxu0 0.0
    %1100 = vmatpush2.msra.mxu0 0.0
    %1101 = vmatprep.subr.mxu0 0.0
    %1102 = vmatpush2.msra.mxu0 0.0
    %1103 = vmatprep.subr.mxu0 0.0
    %1104 = vmatpush2.msra.mxu0 0.0
    %1105 = vmatprep.subr.mxu0 0.0
    %1106 = vmatpush2.msra.mxu0 0.0
    %1107 = vmatprep.mubr.f32.mxu0 0.0
    %1108 = vmatmul.mubr.f32.gmra.mxu0 %v1041
    %v1109 = vpop.f32.mrf.mxu0
    %v1110 = vadd.f32 %v1038, %v1109
    %v1111 = vpop.f32.mrf.mxu0
    %1112 = vdwg.mxu0
    %1114 = vrot.lane.b32.xlu0 %v1110, 6
    %v1115 = vpop.permute.xlu0 %1114
    %v1117 = vmul.f32 %v1110, %v1115
    %1118 = vrot.lane.b32.xlu0 %v1110, 4
    %v1119 = vpop.permute.xlu0 %1118
    %v1121 = vmul.f32 %v1110, %v1119
    %1123 = vrot.lane.b32.xlu0 %v1121, 127
    %v1124 = vpop.permute.xlu0 %1123
    %v1126 = vadd.f32 %v1117, %v1124
    %1127 = vrot.lane.b32.xlu0 %v1110, 5
    %v1128 = vpop.permute.xlu0 %1127
    %v1130 = vmul.f32 %v1110, %v1128
    %1131 = vrot.lane.b32.xlu0 %v1110, 3
    %v1132 = vpop.permute.xlu0 %1131
    %v1134 = vmul.f32 %v1110, %v1132
    %1136 = vrot.lane.b32.xlu0 %v1134, 127
    %v1137 = vpop.permute.xlu0 %1136
    %v1139 = vadd.f32 %v1130, %v1137
    %1140 = vrot.lane.b32.xlu0 %v1110, 2
    %v1141 = vpop.permute.xlu0 %1140
    %v1143 = vmul.f32 %v1110, %v1141
    %1145 = vrot.lane.b32.xlu0 %v1143, 127
    %v1146 = vpop.permute.xlu0 %1145
    %v1148 = vadd.f32 %v1121, %v1146
    %1149 = vrot.lane.b32.xlu0 %v1110, 126
    %v1150 = vpop.permute.xlu0 %1149
    %v1152 = vadd.f32 %v1148, %v1150
    %1153 = vrot.lane.b32.xlu0 %v1110, 9
    %v1154 = vpop.permute.xlu0 %1153
    %v1156 = vmul.f32 %v1110, %v1154
    %1157 = vrot.lane.b32.xlu0 %v1110, 7
    %v1158 = vpop.permute.xlu0 %1157
    %v1160 = vmul.f32 %v1110, %v1158
    %1162 = vrot.lane.b32.xlu0 %v1160, 127
    %v1163 = vpop.permute.xlu0 %1162
    %v1165 = vadd.f32 %v1156, %v1163
    %1166 = vrot.lane.b32.xlu0 %v1110, 8
    %v1167 = vpop.permute.xlu0 %1166
    %v1169 = vmul.f32 %v1110, %v1167
    %1171 = vrot.lane.b32.xlu0 %v1117, 127
    %v1172 = vpop.permute.xlu0 %1171
    %v1174 = vadd.f32 %v1169, %v1172
    %1176 = vrot.lane.b32.xlu0 %v1130, 127
    %v1177 = vpop.permute.xlu0 %1176
    %v1179 = vadd.f32 %v1160, %v1177
    %v1180 = vadd.f32 %v1179, %v1150
    %1181 = vrot.lane.b32.xlu0 %v1110, 12
    %v1182 = vpop.permute.xlu0 %1181
    %v1184 = vmul.f32 %v1110, %v1182
    %1185 = vrot.lane.b32.xlu0 %v1110, 10
    %v1186 = vpop.permute.xlu0 %1185
    %v1188 = vmul.f32 %v1110, %v1186
    %1190 = vrot.lane.b32.xlu0 %v1188, 127
    %v1191 = vpop.permute.xlu0 %1190
    %v1193 = vadd.f32 %v1184, %v1191
    %1194 = vrot.lane.b32.xlu0 %v1110, 11
    %v1195 = vpop.permute.xlu0 %1194
    %v1197 = vmul.f32 %v1110, %v1195
    %1199 = vrot.lane.b32.xlu0 %v1156, 127
    %v1200 = vpop.permute.xlu0 %1199
    %v1202 = vadd.f32 %v1197, %v1200
    %1204 = vrot.lane.b32.xlu0 %v1169, 127
    %v1205 = vpop.permute.xlu0 %1204
    %v1207 = vadd.f32 %v1188, %v1205
    %v1208 = vadd.f32 %v1207, %v1150
    %1209 = vrot.lane.b32.xlu0 %v1110, 15
    %v1210 = vpop.permute.xlu0 %1209
    %v1212 = vmul.f32 %v1110, %v1210
    %1213 = vrot.lane.b32.xlu0 %v1110, 13
    %v1214 = vpop.permute.xlu0 %1213
    %v1216 = vmul.f32 %v1110, %v1214
    %1218 = vrot.lane.b32.xlu0 %v1216, 127
    %v1219 = vpop.permute.xlu0 %1218
    %v1221 = vadd.f32 %v1212, %v1219
    %1222 = vrot.lane.b32.xlu0 %v1110, 14
    %v1223 = vpop.permute.xlu0 %1222
    %v1225 = vmul.f32 %v1110, %v1223
    %1227 = vrot.lane.b32.xlu0 %v1184, 127
    %v1228 = vpop.permute.xlu0 %1227
    %v1230 = vadd.f32 %v1225, %v1228
    %1232 = vrot.lane.b32.xlu0 %v1197, 127
    %v1233 = vpop.permute.xlu0 %1232
    %v1235 = vadd.f32 %v1216, %v1233
    %v1236 = vadd.f32 %v1235, %v1150
    %1238 = vrot.lane.b32.xlu0 %v1193, 6
    %v1239 = vpop.permute.xlu0 %1238
    %v1241 = vmul.f32 %v1110, %v1239
    %1243 = vrot.lane.b32.xlu0 %v1221, 4
    %v1244 = vpop.permute.xlu0 %1243
    %v1246 = vmul.f32 %v1110, %v1244
    %1248 = vrot.lane.b32.xlu0 %v1246, 127
    %v1249 = vpop.permute.xlu0 %1248
    %v1251 = vadd.f32 %v1241, %v1249
    %1253 = vrot.lane.b32.xlu0 %v1202, 6
    %v1254 = vpop.permute.xlu0 %1253
    %v1256 = vmul.f32 %v1110, %v1254
    %1258 = vrot.lane.b32.xlu0 %v1230, 4
    %v1259 = vpop.permute.xlu0 %1258
    %v1261 = vmul.f32 %v1110, %v1259
    %1263 = vrot.lane.b32.xlu0 %v1261, 127
    %v1264 = vpop.permute.xlu0 %1263
    %v1266 = vadd.f32 %v1256, %v1264
    %1268 = vrot.lane.b32.xlu0 %v1208, 6
    %v1269 = vpop.permute.xlu0 %1268
    %v1271 = vmul.f32 %v1110, %v1269
    %1273 = vrot.lane.b32.xlu0 %v1236, 4
    %v1274 = vpop.permute.xlu0 %1273
    %v1276 = vmul.f32 %v1110, %v1274
    %1278 = vrot.lane.b32.xlu0 %v1276, 127
    %v1279 = vpop.permute.xlu0 %1278
    %v1281 = vadd.f32 %v1271, %v1279
    %v1282 = vadd.f32 %v1281, %v1150
    %1283 = vrot.lane.b32.xlu0 %v1193, 9
    %v1284 = vpop.permute.xlu0 %1283
    %v1286 = vmul.f32 %v1110, %v1284
    %1287 = vrot.lane.b32.xlu0 %v1221, 7
    %v1288 = vpop.permute.xlu0 %1287
    %v1290 = vmul.f32 %v1110, %v1288
    %1292 = vrot.lane.b32.xlu0 %v1290, 127
    %v1293 = vpop.permute.xlu0 %1292
    %v1295 = vadd.f32 %v1286, %v1293
    %1296 = vrot.lane.b32.xlu0 %v1202, 9
    %v1297 = vpop.permute.xlu0 %1296
    %v1299 = vmul.f32 %v1110, %v1297
    %1300 = vrot.lane.b32.xlu0 %v1230, 7
    %v1301 = vpop.permute.xlu0 %1300
    %v1303 = vmul.f32 %v1110, %v1301
    %1305 = vrot.lane.b32.xlu0 %v1303, 127
    %v1306 = vpop.permute.xlu0 %1305
    %v1308 = vadd.f32 %v1299, %v1306
    %1309 = vrot.lane.b32.xlu0 %v1208, 9
    %v1310 = vpop.permute.xlu0 %1309
    %v1312 = vmul.f32 %v1110, %v1310
    %1313 = vrot.lane.b32.xlu0 %v1236, 7
    %v1314 = vpop.permute.xlu0 %1313
    %v1316 = vmul.f32 %v1110, %v1314
    %1318 = vrot.lane.b32.xlu0 %v1316, 127
    %v1319 = vpop.permute.xlu0 %1318
    %v1321 = vadd.f32 %v1312, %v1319
    %v1322 = vadd.f32 %v1321, %v1150
    %1324 = vrot.lane.b32.xlu0 %v1139, 1
    %v1325 = vpop.permute.xlu0 %1324
    %1328 = vrot.lane.b32.xlu0 %v1152, 2
    %v1329 = vpop.permute.xlu0 %1328
    %1332 = vrot.lane.b32.xlu0 %v1174, 1
    %v1333 = vpop.permute.xlu0 %1332
    %1336 = vrot.lane.b32.xlu0 %v1180, 2
    %v1337 = vpop.permute.xlu0 %1336
    %1339 = vrot.lane.b32.xlu0 %v1202, 1
    %v1340 = vpop.permute.xlu0 %1339
    %1342 = vrot.lane.b32.xlu0 %v1208, 2
    %v1343 = vpop.permute.xlu0 %1342
    %vm1345 = vcmask 48128
    %v1346 = vsel %vm1345, %v1110, %v1126
    %vm1347 = vcmask 56320
    %v1348 = vsel %vm1347, %v1346, %v1325
    %v1349 = vsel %vm409, %v1348, %v1329
    %vm1350 = vcmask 72704
    %v1351 = vsel %vm1350, %v1349, %v1165
    %vm1352 = vcmask 80896
    %v1353 = vsel %vm1352, %v1351, %v1333
    %vm1354 = vcmask 89088
    %v1355 = vsel %vm1354, %v1353, %v1337
    %vm1356 = vcmask 97280
    %v1357 = vsel %vm1356, %v1355, %v1193
    %vm1358 = vcmask 105472
    %v1359 = vsel %vm1358, %v1357, %v1340
    %vm1360 = vcmask 113664
    %v1361 = vsel %vm1360, %v1359, %v1343
    %vm1362 = vcmask 121856
    %v1363 = vsel %vm1362, %v1361, %v1221
    %1364 = vrot.lane.b32.xlu0 %v1230, 113
    %v1365 = vpop.permute.xlu0 %1364
    %1367 = vrot.lane.b32.xlu0 %v1236, 114
    %v1368 = vpop.permute.xlu0 %1367
    %1371 = vrot.lane.b32.xlu0 %v1251, 112
    %v1372 = vpop.permute.xlu0 %1371
    %1375 = vrot.lane.b32.xlu0 %v1266, 113
    %v1376 = vpop.permute.xlu0 %1375
    %1379 = vrot.lane.b32.xlu0 %v1282, 114
    %v1380 = vpop.permute.xlu0 %1379
    %1383 = vrot.lane.b32.xlu0 %v1295, 112
    %v1384 = vpop.permute.xlu0 %1383
    %1387 = vrot.lane.b32.xlu0 %v1308, 113
    %v1388 = vpop.permute.xlu0 %1387
    %1391 = vrot.lane.b32.xlu0 %v1322, 114
    %v1392 = vpop.permute.xlu0 %1391
    %vm1394 = vcmask 7168
    %v1395 = vsel %vm1394, %v1365, %v1368
    %vm1396 = vcmask 15360
    %v1397 = vsel %vm1396, %v1395, %v1372
    %vm1398 = vcmask 23552
    %v1399 = vsel %vm1398, %v1397, %v1376
    %vm1400 = vcmask 31744
    %v1401 = vsel %vm1400, %v1399, %v1380
    %vm1402 = vcmask 39936
    %v1403 = vsel %vm1402, %v1401, %v1384
    %v1404 = vsel %vm1345, %v1403, %v1388
    %v1405 = vsel %vm1347, %v1404, %v1392
    %1407 = vrot.lane.b32.xlu0 %v1405, 16
    %v1408 = vpop.permute.xlu0 %1407
    %v1410 = vsel %vm411, %v1363, %v1408
    %vm1411 = vcmask 189440
    %1412 = vst.msk [vmem:[#allocation2] sm:$0x3] %vm1411, %v1410
    // Predicated region
    $region46: #{tpu_custom_call.1} parent=1 // pred_check
      _
    $region47: #{tpu_custom_call.1} parent=1 // pred_check_branch
      %1414 = sbr.rel (0) target = $region49
    $region48: #{tpu_custom_call.1} parent=1 // pred_region
      %s1416 = ssub.s32 32, 32
      %1417 = vsyncadd [#allocation3], %s1416
      %s1419 = sshll.u32 [#allocation2], 4
      %s1420 = int_to_ptr.vmem [resolvable:$true] %s1419
      %1422 = dma.vmem_to_hbm [thread:$0]  %s1420, 32, %s11, [#allocation3]
    $region49: #{tpu_custom_call.1} parent=1 // pred_fallthru
      _
    // Predicated region
    $region50: #{tpu_custom_call.1} parent=1 // pred_check
      _
    $region51: #{tpu_custom_call.1} parent=1 // pred_check_branch
      %1424 = sbr.rel (0) target = $region53
    $region52: #{tpu_custom_call.1} parent=1 // pred_region
      %1425 = dma.done [#allocation3], 32
    $region53: #{tpu_custom_call.1} parent=1 // pred_fallthru
      _
    %1426 = vsyncpa [#allocation3], 1

</llo_original>
